<compile_context>
chip_gen: v6e
topology: v6e:2x2x1
jax: 0.10.0
libtpu: 0.0.40
codegen_flags: <defaults>
</compile_context>

<pallas_src>
import functools

import jax
import jax.numpy as jnp
from jax import lax
from jax.experimental import pallas as pl
from jax.experimental.pallas import tpu as pltpu

# Deterministic stand-ins for absl FLAGS used by the module.
FLAGS = dict(prop_pm_w=1.0, prop_p_w=1.0, prop_r_reg_w=1.0, prop_sym_w=1.0)


# ----------------------------------------------------------------------------
# Small-math helpers (GPV-Pose utilities) — plain JAX glue.
# ----------------------------------------------------------------------------
def _normalize(v, eps=1e-12):
    return v / (jnp.linalg.norm(v, axis=-1, keepdims=True) + eps)


def _rodrigues(u, theta):
    c = jnp.cos(theta)
    s = jnp.sin(theta)
    zero = jnp.zeros((), dtype=u.dtype)
    K = jnp.stack([jnp.stack([zero, -u[2], u[1]]),
                   jnp.stack([u[2], zero, -u[0]]),
                   jnp.stack([-u[1], u[0], zero])])
    return c * jnp.eye(3, dtype=u.dtype) + (1.0 - c) * jnp.outer(u, u) + s * K


def get_vertical_rot_vec(c1, c2, y, z):
    y = y.reshape(-1)
    z = z.reshape(-1)
    rot_x = jnp.cross(y, z)
    rot_x = rot_x / (jnp.linalg.norm(rot_x) + 1e-8)
    cos_yz = jnp.clip(jnp.sum(y * z), -1.0 + 1e-6, 1.0 - 1e-6)
    theta = jnp.arccos(cos_yz)
    theta_2 = c1 / (c1 + c2) * (theta - jnp.pi / 2.0)
    theta_1 = c2 / (c1 + c2) * (theta - jnp.pi / 2.0)
    new_y = _rodrigues(rot_x, theta_1) @ y
    new_z = _rodrigues(rot_x, -theta_2) @ z
    return new_y, new_z


def get_rot_mat_y_first(y, x):
    y = _normalize(y)
    z = _normalize(jnp.cross(x, y))
    x = jnp.cross(y, z)
    return jnp.stack((x, y, z), axis=-1)


def _per_batch_pR(sym0, f_g, f_r, p_g, p_r, gR_col0):
    c2 = jnp.where(sym0 == 1, 1e-5, f_r)
    z = jnp.where(sym0 == 1, gR_col0, p_r)
    new_y, new_x = get_vertical_rot_vec(f_g, c2, p_g, z)
    return get_rot_mat_y_first(new_y[None, :], new_x[None, :])[0]


# ----------------------------------------------------------------------------
# Pallas kernel.
# ----------------------------------------------------------------------------
# Packed per-batch parameter layout (37 f32 scalars, lives in SMEM):
#   [0:9)   gR   (row-major)
#   [9:12)  g_t
#   [12:15) p_t
#   [15:24) pR   (row-major, predicted rotation)
#   [24:27) p_g
#   [27:30) p_r
#   [30:33) p_z  (= normalize(cross(p_r, p_g)))
#   [33:36) sgn  (canonical reflection signs for Prop_sym)
#   [36]    f_g + f_r
_NPARAM = 37

# Packed per-batch output lanes:
#   0: sum_valid |pR^T(P-p_t) - gR^T(P-g_t)|      (Prop_pm numerator)
#   1: sum_mask  |(P-p_t).p_g - cano_y|           (Prop_point_cano, y)
#   2: sum_mask  |(P-p_t).p_r - cano_x|           (Prop_point_cano, x)
#   3: sum_mask  |Recon - (gR(sgn*cano) + g_t)|   (Prop_sym recon)
#   4: sum_mask  |rot180_{p_g}(P) - Recon|        (Prop_sym rt, case 1)
#   5: sum_mask  |reflect_{p_z}(P) - Recon|       (Prop_sym rt, case 2)
#   6: sum_valid |P - Recon|                      (case-4 global L1 numerator)
#   7: |1 - (f_g + f_r)|                          (Prop_r_reg term)


def _prop_rot_kernel(params_ref, p_ref, re_ref, mask_ref, out_ref, *,
                     btile, n_real, r_blocks):
    step = pl.program_id(0)

    # Validity mask for lanes that pad N up to r_blocks*128 (shared by all local
    # batch elements of this step).  Skipped entirely when N is already aligned.
    if n_real == r_blocks * 128:
        valid = None
    else:
        pt_idx = (lax.broadcasted_iota(jnp.int32, (r_blocks, 128), 0) * 128
                  + lax.broadcasted_iota(jnp.int32, (r_blocks, 128), 1))
        valid = (pt_idx < n_real).astype(jnp.float32)

    def vsum(x):                       # sum over real (non-pad) points -> (1, 1)
        return jnp.sum(x if valid is None else valid * x, keepdims=True)

    def msum(m, x):                    # masked sum -> (1, 1)
        return jnp.sum(m * x, keepdims=True)

    for lb in range(btile):            # static unroll over local batch elements
        b = step * btile + lb
        par = lambda k: params_ref[b, k]     # cheap SMEM scalar reads

        gR = [[par(3 * r + c) for c in range(3)] for r in range(3)]
        g_t = [par(9 + i) for i in range(3)]
        p_t = [par(12 + i) for i in range(3)]
        pR = [[par(15 + 3 * r + c) for c in range(3)] for r in range(3)]
        p_g = [par(24 + i) for i in range(3)]
        p_r = [par(27 + i) for i in range(3)]
        p_z = [par(30 + i) for i in range(3)]
        sgn = [par(33 + i) for i in range(3)]
        f_sum = par(36)

        msk = mask_ref[lb]                          # (R, 128)
        P = [p_ref[lb, c] for c in range(3)]        # gt point planes (R, 128)
        Re = [re_ref[lb, c] for c in range(3)]      # reconstructed point planes

        dg = [P[c] - g_t[c] for c in range(3)]      # P - g_t
        dp = [P[c] - p_t[c] for c in range(3)]      # P - p_t

        # canonical coords cano = gR^T (P - g_t); predicted pmc = pR^T (P - p_t)
        cano = [gR[0][j] * dg[0] + gR[1][j] * dg[1] + gR[2][j] * dg[2]
                for j in range(3)]
        pmc = [pR[0][j] * dp[0] + pR[1][j] * dp[1] + pR[2][j] * dp[2]
               for j in range(3)]

        # ---- Prop_pm (unmasked over real points)
        s_pm = vsum(jnp.abs(pmc[0] - cano[0]) + jnp.abs(pmc[1] - cano[1])
                    + jnp.abs(pmc[2] - cano[2]))

        # ---- Prop_point_cano projections (proj_g reused below for case-1 rt)
        proj_g = p_g[0] * dp[0] + p_g[1] * dp[1] + p_g[2] * dp[2]
        proj_r = p_r[0] * dp[0] + p_r[1] * dp[1] + p_r[2] * dp[2]
        s_geoy = msum(msk, jnp.abs(proj_g - cano[1]))
        s_geox = msum(msk, jnp.abs(proj_r - cano[0]))

        # ---- Prop_sym recon: gt_PC = gR (sgn * cano) + g_t, compared to Recon
        sc = [sgn[j] * cano[j] for j in range(3)]
        s_recon = msum(
            msk,
            jnp.abs(Re[0] - (gR[0][0] * sc[0] + gR[0][1] * sc[1] + gR[0][2] * sc[2] + g_t[0]))
            + jnp.abs(Re[1] - (gR[1][0] * sc[0] + gR[1][1] * sc[1] + gR[1][2] * sc[2] + g_t[1]))
            + jnp.abs(Re[2] - (gR[2][0] * sc[0] + gR[2][1] * sc[1] + gR[2][2] * sc[2] + g_t[2])))

        # ---- Prop_sym rt, case 1: 180-degree rotation about p_g through p_t
        s_rt1 = msum(
            msk,
            jnp.abs(P[0] + 2.0 * (p_g[0] * proj_g - dp[0]) - Re[0])
            + jnp.abs(P[1] + 2.0 * (p_g[1] * proj_g - dp[1]) - Re[1])
            + jnp.abs(P[2] + 2.0 * (p_g[2] * proj_g - dp[2]) - Re[2]))

        # ---- Prop_sym rt, case 2: reflection across the plane (p_t, normal p_z)
        proj_z = p_z[0] * dp[0] + p_z[1] * dp[1] + p_z[2] * dp[2]
        s_rt2 = msum(
            msk,
            jnp.abs(P[0] - 2.0 * p_z[0] * proj_z - Re[0])
            + jnp.abs(P[1] - 2.0 * p_z[1] * proj_z - Re[1])
            + jnp.abs(P[2] - 2.0 * p_z[2] * proj_z - Re[2]))

        # ---- case-4 fallback numerator: full (unmasked) L1(P, Recon)
        s_full = vsum(jnp.abs(P[0] - Re[0]) + jnp.abs(P[1] - Re[1])
                      + jnp.abs(P[2] - Re[2]))

        # ---- Prop_r_reg term for this batch element
        s_reg = jnp.zeros((1, 1), jnp.float32) + jnp.abs(1.0 - f_sum)

        # single packed store per batch element
        row = jnp.concatenate(
            [s_pm, s_geoy, s_geox, s_recon, s_rt1, s_rt2, s_full, s_reg], axis=1)
        out_ref[0, lb:lb + 1, :] = row


def _pick_btile(bs, r_blocks):
    # Pack several batch elements per grid step to amortize the ~0.35us step
    # overhead, but keep >=2 grid steps when bs>=2 so both v7x TensorCores get work.
    btile = 1
    for bt in (8, 4, 2):
        if bs % bt == 0 and bs // bt >= 2:
            btile = bt
            break
    # Keep the double-buffered per-step working set (P + Recon + mask) modest so
    # large point clouds stay well inside v7x's smaller VMEM.
    per_batch_bytes = (3 + 3 + 1) * r_blocks * 128 * 4
    while btile > 1 and 2 * btile * per_batch_bytes > (8 << 20):
        btile //= 2
    # TODO(synk): for extremely dense clouds (per-batch block > ~8 MiB even at
    # btile=1) add a point-chunk grid axis ("arbitrary") with accumulated partials.
    return btile


def run_prop_kernel(params, P_cn, Re_cn, mask_f, n_real):
    bs, _, r_blocks, _ = P_cn.shape
    btile = _pick_btile(bs, r_blocks)
    nsteps = bs // btile

    kernel = functools.partial(_prop_rot_kernel, btile=btile, n_real=n_real,
                               r_blocks=r_blocks)
    pc_spec = pl.BlockSpec((btile, 3, r_blocks, 128), lambda i: (i, 0, 0, 0))
    out = pl.pallas_call(
        kernel,
        out_shape=jax.ShapeDtypeStruct((nsteps, btile, 8), jnp.float32),
        grid=(nsteps,),
        in_specs=[
            pl.BlockSpec(memory_space=pltpu.MemorySpace.SMEM),            # packed params
            pc_spec,                                                      # gt points
            pc_spec,                                                      # recon points
            pl.BlockSpec((btile, r_blocks, 128), lambda i: (i, 0, 0)),    # point mask
        ],
        out_specs=pl.BlockSpec((1, btile, 8), lambda i: (i, 0, 0)),
        compiler_params=pltpu.CompilerParams(dimension_semantics=("parallel",)),
    )(params, P_cn, Re_cn, mask_f)
    return out.reshape(bs, 8)


# ----------------------------------------------------------------------------
# Forward pass (mirrors prop_rot_loss.forward).
# ----------------------------------------------------------------------------
def prop_rot_loss_forward(namelist, pred_list, gt_list, sym):
    PC    = gt_list['Points'].astype(jnp.float32)    # (bs, N, 3)
    gR    = gt_list['R'].astype(jnp.float32)         # (bs, 3, 3)
    g_t   = gt_list['T'].astype(jnp.float32)         # (bs, 3)
    mask  = gt_list['Point_mask']                    # (bs, N) bool
    p_g   = pred_list['Rot1'].astype(jnp.float32)    # (bs, 3)
    f_g   = pred_list['Rot1_f'].astype(jnp.float32)  # (bs,)
    p_r   = pred_list['Rot2'].astype(jnp.float32)    # (bs, 3)
    f_r   = pred_list['Rot2_f'].astype(jnp.float32)  # (bs,)
    p_t   = pred_list['Tran'].astype(jnp.float32)    # (bs, 3)
    recon = pred_list['Recon'].astype(jnp.float32)   # (bs, N, 3)
    sym   = sym.astype(jnp.int32)                    # (bs, 4)

    bs, N, _ = PC.shape

    sym0 = sym[:, 0]
    rest = jnp.sum(sym[:, 1:], axis=1)
    case1 = (sym0 == 1) & (rest > 0)
    case2 = (sym0 == 0) & (sym[:, 1] == 1)
    case3 = (sym0 == 1) & (rest == 0)   # contributes nothing to Prop_sym (as in PyTorch)
    case4 = jnp.logical_not(case1 | case2 | case3)

    # predicted per-batch rotation for the point-matching loss (3x3 math = glue)
    pR = jax.vmap(_per_batch_pR)(sym0, f_g, f_r, p_g, p_r, gR[:, :, 0])

    # symmetry plane normal for Prop_sym case 2
    p_z = jnp.cross(p_r, p_g)
    p_z = p_z / (jnp.linalg.norm(p_z, axis=-1, keepdims=True) + 1e-8)

    # canonical reflection signs for Prop_sym
    sgn = jnp.where(case1[:, None], jnp.array([-1.0, 1.0, -1.0], jnp.float32),
          jnp.where(case2[:, None], jnp.array([1.0, 1.0, -1.0], jnp.float32),
                    jnp.ones((3,), jnp.float32)))

    # ---- pack all per-batch scalar parameters into one SMEM table (bs, 37)
    params = jnp.concatenate(
        [gR.reshape(bs, 9), g_t, p_t, pR.reshape(bs, 9),
         p_g, p_r, p_z, sgn, (f_g + f_r)[:, None]], axis=1).astype(jnp.float32)
    assert params.shape == (bs, _NPARAM)

    # ---- channels-first lane-plane layout, N padded to a multiple of 128
    # TODO(synk): keeping PC/Recon channels-first upstream (or allow_input_fusion)
    # would avoid the minor-dim transposes below.
    n_pad = max(128, ((N + 127) // 128) * 128)
    pad = n_pad - N
    r_blocks = n_pad // 128

    def to_planes(x):                   # (bs, N, 3) -> (bs, 3, R, 128)
        if pad:
            x = jnp.pad(x, ((0, 0), (0, pad), (0, 0)))
        return jnp.transpose(x, (0, 2, 1)).reshape(bs, 3, r_blocks, 128)

    P_cn = to_planes(PC)
    Re_cn = to_planes(recon)
    mask_f = mask.astype(jnp.float32)
    if pad:
        mask_f = jnp.pad(mask_f, ((0, 0), (0, pad)))
    mask_f = mask_f.reshape(bs, r_blocks, 128)

    out = run_prop_kernel(params, P_cn, Re_cn, mask_f, N)
    s_pm, s_geoy, s_geox = out[:, 0], out[:, 1], out[:, 2]
    s_recon, s_rt1, s_rt2 = out[:, 3], out[:, 4], out[:, 5]
    s_full, s_reg = out[:, 6], out[:, 7]

    c1f = case1.astype(jnp.float32)
    c2f = case2.astype(jnp.float32)
    c4f = case4.astype(jnp.float32)
    count = jnp.sum(mask.astype(jnp.float32), axis=1)
    # TODO(synk): an all-False point mask would make the PyTorch code NaN; we guard with max(count, 1).
    denom = 3.0 * jnp.maximum(count, 1.0)

    loss_list = {}
    if 'Prop_pm' in namelist:
        loss_list['Prop_pm'] = FLAGS['prop_pm_w'] * (jnp.sum(s_pm / (3.0 * N)) / bs)

    if 'Prop_point_cano' in namelist:
        # matches PyTorch: geo_y mean over bs*N (incl. symmetric samples); geo_x is a
        # per-batch mean over N averaged over non-symmetric samples only.
        res_geo_y = jnp.sum(s_geoy) / (bs * N)
        non_sym = (sym0 == 0).astype(jnp.float32)
        valid_ns = jnp.sum(non_sym)
        res_geo_x = jnp.where(valid_ns > 0,
                              jnp.sum(non_sym * (s_geox / N)) / jnp.maximum(valid_ns, 1.0),
                              0.0)
        loss_list['Prop_point_cano'] = FLAGS['prop_p_w'] * (res_geo_y + res_geo_x)

    if 'Prop_r_reg' in namelist:
        loss_list['Prop_r_reg'] = FLAGS['prop_r_reg_w'] * jnp.mean(s_reg)

    if 'Prop_sym' in namelist and FLAGS['prop_sym_w'] > 0:
        global_l1 = jnp.sum(s_full) / (bs * N * 3)
        res_p_recon = (jnp.sum((c1f + c2f) * s_recon / denom)
                       + jnp.sum(c4f) * global_l1) / bs
        res_p_rt = jnp.sum(c1f * s_rt1 / denom + c2f * s_rt2 / denom) / bs
        loss_list['Prop_sym_recon'] = FLAGS['prop_sym_w'] * res_p_recon
        loss_list['Prop_sym_rt'] = FLAGS['prop_sym_w'] * res_p_rt

    return loss_list


# ----------------------------------------------------------------------------
if __name__ == "__main__":
    key = jax.random.PRNGKey(0)
    bs, N = 4, 200          # N not a multiple of 128 -> exercises the padding path
    ks = jax.random.split(key, 12)

    Points = jax.random.normal(ks[0], (bs, N, 3), jnp.float32)
    Recon = Points + 0.05 * jax.random.normal(ks[1], (bs, N, 3), jnp.float32)

    # ground-truth proper rotations built from random orthonormalised vectors
    ry = _normalize(jax.random.normal(ks[2], (bs, 3), jnp.float32))
    rx = _normalize(jax.random.normal(ks[3], (bs, 3), jnp.float32))
    gR = jax.vmap(lambda y, x: get_rot_mat_y_first(y[None], x[None])[0])(ry, rx)
    gT = 0.1 * jax.random.normal(ks[4], (bs, 3), jnp.float32)

    Rot1 = _normalize(jax.random.normal(ks[5], (bs, 3), jnp.float32))
    Rot2 = _normalize(jax.random.normal(ks[6], (bs, 3), jnp.float32))
    Rot1_f = jax.random.uniform(ks[7], (bs,), jnp.float32, 0.1, 1.0)
    Rot2_f = jax.random.uniform(ks[8], (bs,), jnp.float32, 0.1, 1.0)
    Tran = 0.1 * jax.random.normal(ks[9], (bs, 3), jnp.float32)

    Point_mask = jax.random.uniform(ks[10], (bs, N)) > 0.2
    Point_mask = Point_mask.at[:, 0].set(True)

    # one batch element per sym branch: axis-sym+refl, planar-sym, axis-only, no-sym
    sym = jnp.array([[1, 1, 0, 0],
                     [0, 1, 0, 0],
                     [1, 0, 0, 0],
                     [0, 0, 0, 0]], jnp.int32)

    pred_list = {'Rot1': Rot1, 'Rot1_f': Rot1_f, 'Rot2': Rot2, 'Rot2_f': Rot2_f,
                 'Tran': Tran, 'Recon': Recon}
    gt_list = {'Points': Points, 'R': gR, 'T': gT, 'Point_mask': Point_mask}
    namelist = ['Prop_pm', 'Prop_point_cano', 'Prop_r_reg', 'Prop_sym']

    losses = prop_rot_loss_forward(namelist, pred_list, gt_list, sym)
    losses = jax.tree_util.tree_map(jax.block_until_ready, losses)

    for k, v in losses.items():
        assert bool(jnp.isfinite(v)), k

    print("KERNEL_OK")
</pallas_src>

<mosaic_0001>
module attributes {stable_mosaic.version = 11 : i64} {
  func.func @_prop_rot_kernel(%arg0: i32, %arg1: memref<4x37xf32, #tpu.memory_space<smem>>, %arg2: memref<2x3x2x128xf32, #tpu.memory_space<vmem>>, %arg3: memref<2x3x2x128xf32, #tpu.memory_space<vmem>>, %arg4: memref<2x2x128xf32, #tpu.memory_space<vmem>>, %arg5: memref<1x2x8xf32, #tpu.memory_space<vmem>>) attributes {dimension_semantics = [#tpu.dimension_semantics<parallel>], iteration_bounds = array<i64: 2>, scalar_prefetch = 0 : i64, scratch_operands = 0 : i64, tpu.core_type = #tpu.core_type<tc>, window_params = [{transform_indices = @transform_0, window_bounds = array<i64: 4, 37>}, {transform_indices = @transform_1, window_bounds = array<i64: 2, 3, 2, 128>}, {transform_indices = @transform_2, window_bounds = array<i64: 2, 3, 2, 128>}, {transform_indices = @transform_3, window_bounds = array<i64: 2, 2, 128>}, {transform_indices = @transform_4, window_bounds = array<i64: 1, 2, 8>}]} {
    %0 = tpu.iota {dimensions = array<i32: 0>} : vector<2x128xi32>
    %c128_i32 = arith.constant 128 : i32
    %1 = vector.broadcast %c128_i32 : i32 to vector<2x128xi32>
    %2 = arith.muli %0, %1 : vector<2x128xi32>
    %3 = tpu.iota {dimensions = array<i32: 1>} : vector<2x128xi32>
    %4 = arith.addi %2, %3 : vector<2x128xi32>
    %c200_i32 = arith.constant 200 : i32
    %5 = vector.broadcast %c200_i32 : i32 to vector<2x128xi32>
    %6 = arith.cmpi slt, %4, %5 : vector<2x128xi32>
    %7 = arith.extui %6 : vector<2x128xi1> to vector<2x128xi32>
    %8 = arith.sitofp %7 : vector<2x128xi32> to vector<2x128xf32>
    %c2_i32 = arith.constant 2 : i32
    %9 = arith.muli %arg0, %c2_i32 : i32
    %c0_i32 = arith.constant 0 : i32
    %10 = arith.addi %9, %c0_i32 : i32
    %11 = arith.index_cast %10 : i32 to index
    %c0 = arith.constant 0 : index
    %12 = memref.load %arg1[%11, %c0] : memref<4x37xf32, #tpu.memory_space<smem>>
    %13 = arith.index_cast %10 : i32 to index
    %c1 = arith.constant 1 : index
    %14 = memref.load %arg1[%13, %c1] : memref<4x37xf32, #tpu.memory_space<smem>>
    %15 = arith.index_cast %10 : i32 to index
    %c2 = arith.constant 2 : index
    %16 = memref.load %arg1[%15, %c2] : memref<4x37xf32, #tpu.memory_space<smem>>
    %17 = arith.index_cast %10 : i32 to index
    %c3 = arith.constant 3 : index
    %18 = memref.load %arg1[%17, %c3] : memref<4x37xf32, #tpu.memory_space<smem>>
    %19 = arith.index_cast %10 : i32 to index
    %c4 = arith.constant 4 : index
    %20 = memref.load %arg1[%19, %c4] : memref<4x37xf32, #tpu.memory_space<smem>>
    %21 = arith.index_cast %10 : i32 to index
    %c5 = arith.constant 5 : index
    %22 = memref.load %arg1[%21, %c5] : memref<4x37xf32, #tpu.memory_space<smem>>
    %23 = arith.index_cast %10 : i32 to index
    %c6 = arith.constant 6 : index
    %24 = memref.load %arg1[%23, %c6] : memref<4x37xf32, #tpu.memory_space<smem>>
    %25 = arith.index_cast %10 : i32 to index
    %c7 = arith.constant 7 : index
    %26 = memref.load %arg1[%25, %c7] : memref<4x37xf32, #tpu.memory_space<smem>>
    %27 = arith.index_cast %10 : i32 to index
    %c8 = arith.constant 8 : index
    %28 = memref.load %arg1[%27, %c8] : memref<4x37xf32, #tpu.memory_space<smem>>
    %29 = arith.index_cast %10 : i32 to index
    %c9 = arith.constant 9 : index
    %30 = memref.load %arg1[%29, %c9] : memref<4x37xf32, #tpu.memory_space<smem>>
    %31 = arith.index_cast %10 : i32 to index
    %c10 = arith.constant 10 : index
    %32 = memref.load %arg1[%31, %c10] : memref<4x37xf32, #tpu.memory_space<smem>>
    %33 = arith.index_cast %10 : i32 to index
    %c11 = arith.constant 11 : index
    %34 = memref.load %arg1[%33, %c11] : memref<4x37xf32, #tpu.memory_space<smem>>
    %35 = arith.index_cast %10 : i32 to index
    %c12 = arith.constant 12 : index
    %36 = memref.load %arg1[%35, %c12] : memref<4x37xf32, #tpu.memory_space<smem>>
    %37 = arith.index_cast %10 : i32 to index
    %c13 = arith.constant 13 : index
    %38 = memref.load %arg1[%37, %c13] : memref<4x37xf32, #tpu.memory_space<smem>>
    %39 = arith.index_cast %10 : i32 to index
    %c14 = arith.constant 14 : index
    %40 = memref.load %arg1[%39, %c14] : memref<4x37xf32, #tpu.memory_space<smem>>
    %41 = arith.index_cast %10 : i32 to index
    %c15 = arith.constant 15 : index
    %42 = memref.load %arg1[%41, %c15] : memref<4x37xf32, #tpu.memory_space<smem>>
    %43 = arith.index_cast %10 : i32 to index
    %c16 = arith.constant 16 : index
    %44 = memref.load %arg1[%43, %c16] : memref<4x37xf32, #tpu.memory_space<smem>>
    %45 = arith.index_cast %10 : i32 to index
    %c17 = arith.constant 17 : index
    %46 = memref.load %arg1[%45, %c17] : memref<4x37xf32, #tpu.memory_space<smem>>
    %47 = arith.index_cast %10 : i32 to index
    %c18 = arith.constant 18 : index
    %48 = memref.load %arg1[%47, %c18] : memref<4x37xf32, #tpu.memory_space<smem>>
    %49 = arith.index_cast %10 : i32 to index
    %c19 = arith.constant 19 : index
    %50 = memref.load %arg1[%49, %c19] : memref<4x37xf32, #tpu.memory_space<smem>>
    %51 = arith.index_cast %10 : i32 to index
    %c20 = arith.constant 20 : index
    %52 = memref.load %arg1[%51, %c20] : memref<4x37xf32, #tpu.memory_space<smem>>
    %53 = arith.index_cast %10 : i32 to index
    %c21 = arith.constant 21 : index
    %54 = memref.load %arg1[%53, %c21] : memref<4x37xf32, #tpu.memory_space<smem>>
    %55 = arith.index_cast %10 : i32 to index
    %c22 = arith.constant 22 : index
    %56 = memref.load %arg1[%55, %c22] : memref<4x37xf32, #tpu.memory_space<smem>>
    %57 = arith.index_cast %10 : i32 to index
    %c23 = arith.constant 23 : index
    %58 = memref.load %arg1[%57, %c23] : memref<4x37xf32, #tpu.memory_space<smem>>
    %59 = arith.index_cast %10 : i32 to index
    %c24 = arith.constant 24 : index
    %60 = memref.load %arg1[%59, %c24] : memref<4x37xf32, #tpu.memory_space<smem>>
    %61 = arith.index_cast %10 : i32 to index
    %c25 = arith.constant 25 : index
    %62 = memref.load %arg1[%61, %c25] : memref<4x37xf32, #tpu.memory_space<smem>>
    %63 = arith.index_cast %10 : i32 to index
    %c26 = arith.constant 26 : index
    %64 = memref.load %arg1[%63, %c26] : memref<4x37xf32, #tpu.memory_space<smem>>
    %65 = arith.index_cast %10 : i32 to index
    %c27 = arith.constant 27 : index
    %66 = memref.load %arg1[%65, %c27] : memref<4x37xf32, #tpu.memory_space<smem>>
    %67 = arith.index_cast %10 : i32 to index
    %c28 = arith.constant 28 : index
    %68 = memref.load %arg1[%67, %c28] : memref<4x37xf32, #tpu.memory_space<smem>>
    %69 = arith.index_cast %10 : i32 to index
    %c29 = arith.constant 29 : index
    %70 = memref.load %arg1[%69, %c29] : memref<4x37xf32, #tpu.memory_space<smem>>
    %71 = arith.index_cast %10 : i32 to index
    %c30 = arith.constant 30 : index
    %72 = memref.load %arg1[%71, %c30] : memref<4x37xf32, #tpu.memory_space<smem>>
    %73 = arith.index_cast %10 : i32 to index
    %c31 = arith.constant 31 : index
    %74 = memref.load %arg1[%73, %c31] : memref<4x37xf32, #tpu.memory_space<smem>>
    %75 = arith.index_cast %10 : i32 to index
    %c32 = arith.constant 32 : index
    %76 = memref.load %arg1[%75, %c32] : memref<4x37xf32, #tpu.memory_space<smem>>
    %77 = arith.index_cast %10 : i32 to index
    %c33 = arith.constant 33 : index
    %78 = memref.load %arg1[%77, %c33] : memref<4x37xf32, #tpu.memory_space<smem>>
    %79 = arith.index_cast %10 : i32 to index
    %c34 = arith.constant 34 : index
    %80 = memref.load %arg1[%79, %c34] : memref<4x37xf32, #tpu.memory_space<smem>>
    %81 = arith.index_cast %10 : i32 to index
    %c35 = arith.constant 35 : index
    %82 = memref.load %arg1[%81, %c35] : memref<4x37xf32, #tpu.memory_space<smem>>
    %83 = arith.index_cast %10 : i32 to index
    %c36 = arith.constant 36 : index
    %84 = memref.load %arg1[%83, %c36] : memref<4x37xf32, #tpu.memory_space<smem>>
    %c0_0 = arith.constant 0 : index
    %c0_1 = arith.constant 0 : index
    %c0_2 = arith.constant 0 : index
    %85 = vector.load %arg4[%c0_0, %c0_1, %c0_2] : memref<2x2x128xf32, #tpu.memory_space<vmem>>, vector<1x2x128xf32>
    %86 = vector.shape_cast %85 : vector<1x2x128xf32> to vector<2x128xf32>
    %c0_3 = arith.constant 0 : index
    %c0_4 = arith.constant 0 : index
    %c0_5 = arith.constant 0 : index
    %c0_6 = arith.constant 0 : index
    %87 = vector.load %arg2[%c0_3, %c0_4, %c0_5, %c0_6] : memref<2x3x2x128xf32, #tpu.memory_space<vmem>>, vector<1x1x2x128xf32>
    %88 = vector.shape_cast %87 : vector<1x1x2x128xf32> to vector<2x128xf32>
    %c0_7 = arith.constant 0 : index
    %c1_8 = arith.constant 1 : index
    %c0_9 = arith.constant 0 : index
    %c0_10 = arith.constant 0 : index
    %89 = vector.load %arg2[%c0_7, %c1_8, %c0_9, %c0_10] : memref<2x3x2x128xf32, #tpu.memory_space<vmem>>, vector<1x1x2x128xf32>
    %90 = vector.shape_cast %89 : vector<1x1x2x128xf32> to vector<2x128xf32>
    %c0_11 = arith.constant 0 : index
    %c2_12 = arith.constant 2 : index
    %c0_13 = arith.constant 0 : index
    %c0_14 = arith.constant 0 : index
    %91 = vector.load %arg2[%c0_11, %c2_12, %c0_13, %c0_14] : memref<2x3x2x128xf32, #tpu.memory_space<vmem>>, vector<1x1x2x128xf32>
    %92 = vector.shape_cast %91 : vector<1x1x2x128xf32> to vector<2x128xf32>
    %c0_15 = arith.constant 0 : index
    %c0_16 = arith.constant 0 : index
    %c0_17 = arith.constant 0 : index
    %c0_18 = arith.constant 0 : index
    %93 = vector.load %arg3[%c0_15, %c0_16, %c0_17, %c0_18] : memref<2x3x2x128xf32, #tpu.memory_space<vmem>>, vector<1x1x2x128xf32>
    %94 = vector.shape_cast %93 : vector<1x1x2x128xf32> to vector<2x128xf32>
    %c0_19 = arith.constant 0 : index
    %c1_20 = arith.constant 1 : index
    %c0_21 = arith.constant 0 : index
    %c0_22 = arith.constant 0 : index
    %95 = vector.load %arg3[%c0_19, %c1_20, %c0_21, %c0_22] : memref<2x3x2x128xf32, #tpu.memory_space<vmem>>, vector<1x1x2x128xf32>
    %96 = vector.shape_cast %95 : vector<1x1x2x128xf32> to vector<2x128xf32>
    %c0_23 = arith.constant 0 : index
    %c2_24 = arith.constant 2 : index
    %c0_25 = arith.constant 0 : index
    %c0_26 = arith.constant 0 : index
    %97 = vector.load %arg3[%c0_23, %c2_24, %c0_25, %c0_26] : memref<2x3x2x128xf32, #tpu.memory_space<vmem>>, vector<1x1x2x128xf32>
    %98 = vector.shape_cast %97 : vector<1x1x2x128xf32> to vector<2x128xf32>
    %99 = vector.broadcast %30 : f32 to vector<2x128xf32>
    %100 = arith.subf %88, %99 : vector<2x128xf32>
    %101 = vector.broadcast %32 : f32 to vector<2x128xf32>
    %102 = arith.subf %90, %101 : vector<2x128xf32>
    %103 = vector.broadcast %34 : f32 to vector<2x128xf32>
    %104 = arith.subf %92, %103 : vector<2x128xf32>
    %105 = vector.broadcast %36 : f32 to vector<2x128xf32>
    %106 = arith.subf %88, %105 : vector<2x128xf32>
    %107 = vector.broadcast %38 : f32 to vector<2x128xf32>
    %108 = arith.subf %90, %107 : vector<2x128xf32>
    %109 = vector.broadcast %40 : f32 to vector<2x128xf32>
    %110 = arith.subf %92, %109 : vector<2x128xf32>
    %111 = vector.broadcast %12 : f32 to vector<2x128xf32>
    %112 = arith.mulf %111, %100 : vector<2x128xf32>
    %113 = vector.broadcast %18 : f32 to vector<2x128xf32>
    %114 = arith.mulf %113, %102 : vector<2x128xf32>
    %115 = arith.addf %112, %114 : vector<2x128xf32>
    %116 = vector.broadcast %24 : f32 to vector<2x128xf32>
    %117 = arith.mulf %116, %104 : vector<2x128xf32>
    %118 = arith.addf %115, %117 : vector<2x128xf32>
    %119 = vector.broadcast %14 : f32 to vector<2x128xf32>
    %120 = arith.mulf %119, %100 : vector<2x128xf32>
    %121 = vector.broadcast %20 : f32 to vector<2x128xf32>
    %122 = arith.mulf %121, %102 : vector<2x128xf32>
    %123 = arith.addf %120, %122 : vector<2x128xf32>
    %124 = vector.broadcast %26 : f32 to vector<2x128xf32>
    %125 = arith.mulf %124, %104 : vector<2x128xf32>
    %126 = arith.addf %123, %125 : vector<2x128xf32>
    %127 = vector.broadcast %16 : f32 to vector<2x128xf32>
    %128 = arith.mulf %127, %100 : vector<2x128xf32>
    %129 = vector.broadcast %22 : f32 to vector<2x128xf32>
    %130 = arith.mulf %129, %102 : vector<2x128xf32>
    %131 = arith.addf %128, %130 : vector<2x128xf32>
    %132 = vector.broadcast %28 : f32 to vector<2x128xf32>
    %133 = arith.mulf %132, %104 : vector<2x128xf32>
    %134 = arith.addf %131, %133 : vector<2x128xf32>
    %135 = vector.broadcast %42 : f32 to vector<2x128xf32>
    %136 = arith.mulf %135, %106 : vector<2x128xf32>
    %137 = vector.broadcast %48 : f32 to vector<2x128xf32>
    %138 = arith.mulf %137, %108 : vector<2x128xf32>
    %139 = arith.addf %136, %138 : vector<2x128xf32>
    %140 = vector.broadcast %54 : f32 to vector<2x128xf32>
    %141 = arith.mulf %140, %110 : vector<2x128xf32>
    %142 = arith.addf %139, %141 : vector<2x128xf32>
    %143 = vector.broadcast %44 : f32 to vector<2x128xf32>
    %144 = arith.mulf %143, %106 : vector<2x128xf32>
    %145 = vector.broadcast %50 : f32 to vector<2x128xf32>
    %146 = arith.mulf %145, %108 : vector<2x128xf32>
    %147 = arith.addf %144, %146 : vector<2x128xf32>
    %148 = vector.broadcast %56 : f32 to vector<2x128xf32>
    %149 = arith.mulf %148, %110 : vector<2x128xf32>
    %150 = arith.addf %147, %149 : vector<2x128xf32>
    %151 = vector.broadcast %46 : f32 to vector<2x128xf32>
    %152 = arith.mulf %151, %106 : vector<2x128xf32>
    %153 = vector.broadcast %52 : f32 to vector<2x128xf32>
    %154 = arith.mulf %153, %108 : vector<2x128xf32>
    %155 = arith.addf %152, %154 : vector<2x128xf32>
    %156 = vector.broadcast %58 : f32 to vector<2x128xf32>
    %157 = arith.mulf %156, %110 : vector<2x128xf32>
    %158 = arith.addf %155, %157 : vector<2x128xf32>
    %159 = arith.subf %142, %118 : vector<2x128xf32>
    %160 = math.absf %159 : vector<2x128xf32>
    %161 = arith.subf %150, %126 : vector<2x128xf32>
    %162 = math.absf %161 : vector<2x128xf32>
    %163 = arith.addf %160, %162 : vector<2x128xf32>
    %164 = arith.subf %158, %134 : vector<2x128xf32>
    %165 = math.absf %164 : vector<2x128xf32>
    %166 = arith.addf %163, %165 : vector<2x128xf32>
    %167 = arith.mulf %8, %166 : vector<2x128xf32>
    %168 = vector.shape_cast %167 : vector<2x128xf32> to vector<1x2x128xf32>
    %cst = arith.constant dense<0.000000e+00> : vector<1xf32>
    %169 = vector.multi_reduction <add>, %168, %cst [1, 2] : vector<1x2x128xf32> to vector<1xf32>
    %170 = vector.shape_cast %169 : vector<1xf32> to vector<1x1x1xf32>
    %171 = vector.extract %170[0, 0, 0] : f32 from vector<1x1x1xf32>
    %172 = vector.broadcast %171 : f32 to vector<1x1xf32>
    %173 = vector.broadcast %60 : f32 to vector<2x128xf32>
    %174 = arith.mulf %173, %106 : vector<2x128xf32>
    %175 = vector.broadcast %62 : f32 to vector<2x128xf32>
    %176 = arith.mulf %175, %108 : vector<2x128xf32>
    %177 = arith.addf %174, %176 : vector<2x128xf32>
    %178 = vector.broadcast %64 : f32 to vector<2x128xf32>
    %179 = arith.mulf %178, %110 : vector<2x128xf32>
    %180 = arith.addf %177, %179 : vector<2x128xf32>
    %181 = vector.broadcast %66 : f32 to vector<2x128xf32>
    %182 = arith.mulf %181, %106 : vector<2x128xf32>
    %183 = vector.broadcast %68 : f32 to vector<2x128xf32>
    %184 = arith.mulf %183, %108 : vector<2x128xf32>
    %185 = arith.addf %182, %184 : vector<2x128xf32>
    %186 = vector.broadcast %70 : f32 to vector<2x128xf32>
    %187 = arith.mulf %186, %110 : vector<2x128xf32>
    %188 = arith.addf %185, %187 : vector<2x128xf32>
    %189 = arith.subf %180, %126 : vector<2x128xf32>
    %190 = math.absf %189 : vector<2x128xf32>
    %191 = arith.mulf %86, %190 : vector<2x128xf32>
    %192 = vector.shape_cast %191 : vector<2x128xf32> to vector<1x2x128xf32>
    %cst_27 = arith.constant dense<0.000000e+00> : vector<1xf32>
    %193 = vector.multi_reduction <add>, %192, %cst_27 [1, 2] : vector<1x2x128xf32> to vector<1xf32>
    %194 = vector.shape_cast %193 : vector<1xf32> to vector<1x1x1xf32>
    %195 = vector.extract %194[0, 0, 0] : f32 from vector<1x1x1xf32>
    %196 = vector.broadcast %195 : f32 to vector<1x1xf32>
    %197 = arith.subf %188, %118 : vector<2x128xf32>
    %198 = math.absf %197 : vector<2x128xf32>
    %199 = arith.mulf %86, %198 : vector<2x128xf32>
    %200 = vector.shape_cast %199 : vector<2x128xf32> to vector<1x2x128xf32>
    %cst_28 = arith.constant dense<0.000000e+00> : vector<1xf32>
    %201 = vector.multi_reduction <add>, %200, %cst_28 [1, 2] : vector<1x2x128xf32> to vector<1xf32>
    %202 = vector.shape_cast %201 : vector<1xf32> to vector<1x1x1xf32>
    %203 = vector.extract %202[0, 0, 0] : f32 from vector<1x1x1xf32>
    %204 = vector.broadcast %203 : f32 to vector<1x1xf32>
    %205 = vector.broadcast %78 : f32 to vector<2x128xf32>
    %206 = arith.mulf %205, %118 : vector<2x128xf32>
    %207 = vector.broadcast %80 : f32 to vector<2x128xf32>
    %208 = arith.mulf %207, %126 : vector<2x128xf32>
    %209 = vector.broadcast %82 : f32 to vector<2x128xf32>
    %210 = arith.mulf %209, %134 : vector<2x128xf32>
    %211 = vector.broadcast %12 : f32 to vector<2x128xf32>
    %212 = arith.mulf %211, %206 : vector<2x128xf32>
    %213 = vector.broadcast %14 : f32 to vector<2x128xf32>
    %214 = arith.mulf %213, %208 : vector<2x128xf32>
    %215 = arith.addf %212, %214 : vector<2x128xf32>
    %216 = vector.broadcast %16 : f32 to vector<2x128xf32>
    %217 = arith.mulf %216, %210 : vector<2x128xf32>
    %218 = arith.addf %215, %217 : vector<2x128xf32>
    %219 = vector.broadcast %30 : f32 to vector<2x128xf32>
    %220 = arith.addf %218, %219 : vector<2x128xf32>
    %221 = arith.subf %94, %220 : vector<2x128xf32>
    %222 = math.absf %221 : vector<2x128xf32>
    %223 = vector.broadcast %18 : f32 to vector<2x128xf32>
    %224 = arith.mulf %223, %206 : vector<2x128xf32>
    %225 = vector.broadcast %20 : f32 to vector<2x128xf32>
    %226 = arith.mulf %225, %208 : vector<2x128xf32>
    %227 = arith.addf %224, %226 : vector<2x128xf32>
    %228 = vector.broadcast %22 : f32 to vector<2x128xf32>
    %229 = arith.mulf %228, %210 : vector<2x128xf32>
    %230 = arith.addf %227, %229 : vector<2x128xf32>
    %231 = vector.broadcast %32 : f32 to vector<2x128xf32>
    %232 = arith.addf %230, %231 : vector<2x128xf32>
    %233 = arith.subf %96, %232 : vector<2x128xf32>
    %234 = math.absf %233 : vector<2x128xf32>
    %235 = arith.addf %222, %234 : vector<2x128xf32>
    %236 = vector.broadcast %24 : f32 to vector<2x128xf32>
    %237 = arith.mulf %236, %206 : vector<2x128xf32>
    %238 = vector.broadcast %26 : f32 to vector<2x128xf32>
    %239 = arith.mulf %238, %208 : vector<2x128xf32>
    %240 = arith.addf %237, %239 : vector<2x128xf32>
    %241 = vector.broadcast %28 : f32 to vector<2x128xf32>
    %242 = arith.mulf %241, %210 : vector<2x128xf32>
    %243 = arith.addf %240, %242 : vector<2x128xf32>
    %244 = vector.broadcast %34 : f32 to vector<2x128xf32>
    %245 = arith.addf %243, %244 : vector<2x128xf32>
    %246 = arith.subf %98, %245 : vector<2x128xf32>
    %247 = math.absf %246 : vector<2x128xf32>
    %248 = arith.addf %235, %247 : vector<2x128xf32>
    %249 = arith.mulf %86, %248 : vector<2x128xf32>
    %250 = vector.shape_cast %249 : vector<2x128xf32> to vector<1x2x128xf32>
    %cst_29 = arith.constant dense<0.000000e+00> : vector<1xf32>
    %251 = vector.multi_reduction <add>, %250, %cst_29 [1, 2] : vector<1x2x128xf32> to vector<1xf32>
    %252 = vector.shape_cast %251 : vector<1xf32> to vector<1x1x1xf32>
    %253 = vector.extract %252[0, 0, 0] : f32 from vector<1x1x1xf32>
    %254 = vector.broadcast %253 : f32 to vector<1x1xf32>
    %255 = vector.broadcast %60 : f32 to vector<2x128xf32>
    %256 = arith.mulf %255, %180 : vector<2x128xf32>
    %257 = arith.subf %256, %106 : vector<2x128xf32>
    %cst_30 = arith.constant 2.000000e+00 : f32
    %258 = vector.broadcast %cst_30 : f32 to vector<2x128xf32>
    %259 = arith.mulf %258, %257 : vector<2x128xf32>
    %260 = arith.addf %88, %259 : vector<2x128xf32>
    %261 = arith.subf %260, %94 : vector<2x128xf32>
    %262 = math.absf %261 : vector<2x128xf32>
    %263 = vector.broadcast %62 : f32 to vector<2x128xf32>
    %264 = arith.mulf %263, %180 : vector<2x128xf32>
    %265 = arith.subf %264, %108 : vector<2x128xf32>
    %cst_31 = arith.constant 2.000000e+00 : f32
    %266 = vector.broadcast %cst_31 : f32 to vector<2x128xf32>
    %267 = arith.mulf %266, %265 : vector<2x128xf32>
    %268 = arith.addf %90, %267 : vector<2x128xf32>
    %269 = arith.subf %268, %96 : vector<2x128xf32>
    %270 = math.absf %269 : vector<2x128xf32>
    %271 = arith.addf %262, %270 : vector<2x128xf32>
    %272 = vector.broadcast %64 : f32 to vector<2x128xf32>
    %273 = arith.mulf %272, %180 : vector<2x128xf32>
    %274 = arith.subf %273, %110 : vector<2x128xf32>
    %cst_32 = arith.constant 2.000000e+00 : f32
    %275 = vector.broadcast %cst_32 : f32 to vector<2x128xf32>
    %276 = arith.mulf %275, %274 : vector<2x128xf32>
    %277 = arith.addf %92, %276 : vector<2x128xf32>
    %278 = arith.subf %277, %98 : vector<2x128xf32>
    %279 = math.absf %278 : vector<2x128xf32>
    %280 = arith.addf %271, %279 : vector<2x128xf32>
    %281 = arith.mulf %86, %280 : vector<2x128xf32>
    %282 = vector.shape_cast %281 : vector<2x128xf32> to vector<1x2x128xf32>
    %cst_33 = arith.constant dense<0.000000e+00> : vector<1xf32>
    %283 = vector.multi_reduction <add>, %282, %cst_33 [1, 2] : vector<1x2x128xf32> to vector<1xf32>
    %284 = vector.shape_cast %283 : vector<1xf32> to vector<1x1x1xf32>
    %285 = vector.extract %284[0, 0, 0] : f32 from vector<1x1x1xf32>
    %286 = vector.broadcast %285 : f32 to vector<1x1xf32>
    %287 = vector.broadcast %72 : f32 to vector<2x128xf32>
    %288 = arith.mulf %287, %106 : vector<2x128xf32>
    %289 = vector.broadcast %74 : f32 to vector<2x128xf32>
    %290 = arith.mulf %289, %108 : vector<2x128xf32>
    %291 = arith.addf %288, %290 : vector<2x128xf32>
    %292 = vector.broadcast %76 : f32 to vector<2x128xf32>
    %293 = arith.mulf %292, %110 : vector<2x128xf32>
    %294 = arith.addf %291, %293 : vector<2x128xf32>
    %cst_34 = arith.constant 2.000000e+00 : f32
    %295 = arith.mulf %cst_34, %72 : f32
    %296 = vector.broadcast %295 : f32 to vector<2x128xf32>
    %297 = arith.mulf %296, %294 : vector<2x128xf32>
    %298 = arith.subf %88, %297 : vector<2x128xf32>
    %299 = arith.subf %298, %94 : vector<2x128xf32>
    %300 = math.absf %299 : vector<2x128xf32>
    %cst_35 = arith.constant 2.000000e+00 : f32
    %301 = arith.mulf %cst_35, %74 : f32
    %302 = vector.broadcast %301 : f32 to vector<2x128xf32>
    %303 = arith.mulf %302, %294 : vector<2x128xf32>
    %304 = arith.subf %90, %303 : vector<2x128xf32>
    %305 = arith.subf %304, %96 : vector<2x128xf32>
    %306 = math.absf %305 : vector<2x128xf32>
    %307 = arith.addf %300, %306 : vector<2x128xf32>
    %cst_36 = arith.constant 2.000000e+00 : f32
    %308 = arith.mulf %cst_36, %76 : f32
    %309 = vector.broadcast %308 : f32 to vector<2x128xf32>
    %310 = arith.mulf %309, %294 : vector<2x128xf32>
    %311 = arith.subf %92, %310 : vector<2x128xf32>
    %312 = arith.subf %311, %98 : vector<2x128xf32>
    %313 = math.absf %312 : vector<2x128xf32>
    %314 = arith.addf %307, %313 : vector<2x128xf32>
    %315 = arith.mulf %86, %314 : vector<2x128xf32>
    %316 = vector.shape_cast %315 : vector<2x128xf32> to vector<1x2x128xf32>
    %cst_37 = arith.constant dense<0.000000e+00> : vector<1xf32>
    %317 = vector.multi_reduction <add>, %316, %cst_37 [1, 2] : vector<1x2x128xf32> to vector<1xf32>
    %318 = vector.shape_cast %317 : vector<1xf32> to vector<1x1x1xf32>
    %319 = vector.extract %318[0, 0, 0] : f32 from vector<1x1x1xf32>
    %320 = vector.broadcast %319 : f32 to vector<1x1xf32>
    %321 = arith.subf %88, %94 : vector<2x128xf32>
    %322 = math.absf %321 : vector<2x128xf32>
    %323 = arith.subf %90, %96 : vector<2x128xf32>
    %324 = math.absf %323 : vector<2x128xf32>
    %325 = arith.addf %322, %324 : vector<2x128xf32>
    %326 = arith.subf %92, %98 : vector<2x128xf32>
    %327 = math.absf %326 : vector<2x128xf32>
    %328 = arith.addf %325, %327 : vector<2x128xf32>
    %329 = arith.mulf %8, %328 : vector<2x128xf32>
    %330 = vector.shape_cast %329 : vector<2x128xf32> to vector<1x2x128xf32>
    %cst_38 = arith.constant dense<0.000000e+00> : vector<1xf32>
    %331 = vector.multi_reduction <add>, %330, %cst_38 [1, 2] : vector<1x2x128xf32> to vector<1xf32>
    %332 = vector.shape_cast %331 : vector<1xf32> to vector<1x1x1xf32>
    %333 = vector.extract %332[0, 0, 0] : f32 from vector<1x1x1xf32>
    %334 = vector.broadcast %333 : f32 to vector<1x1xf32>
    %cst_39 = arith.constant 0.000000e+00 : f32
    %335 = vector.broadcast %cst_39 : f32 to vector<1x1xf32>
    %cst_40 = arith.constant 1.000000e+00 : f32
    %336 = arith.subf %cst_40, %84 : f32
    %337 = math.absf %336 : f32
    %338 = vector.broadcast %337 : f32 to vector<1x1xf32>
    %339 = arith.addf %335, %338 : vector<1x1xf32>
    %340 = tpu.concatenate %172, %196, %204, %254, %286, %320, %334, %339 in 1 : vector<1x1xf32>, vector<1x1xf32>, vector<1x1xf32>, vector<1x1xf32>, vector<1x1xf32>, vector<1x1xf32>, vector<1x1xf32>, vector<1x1xf32> -> vector<1x8xf32>
    %c0_41 = arith.constant 0 : index
    %c0_42 = arith.constant 0 : index
    %c0_43 = arith.constant 0 : index
    %341 = vector.load %arg5[%c0_41, %c0_42, %c0_43] : memref<1x2x8xf32, #tpu.memory_space<vmem>>, vector<1x1x8xf32>
    %342 = vector.shape_cast %341 : vector<1x1x8xf32> to vector<1x8xf32>
    %343 = vector.shape_cast %340 : vector<1x8xf32> to vector<1x1x8xf32>
    tpu.vector_store %arg5[%c0_41, %c0_42, %c0_43], %343 {strides = array<i32>} : memref<1x2x8xf32, #tpu.memory_space<vmem>>, vector<1x1x8xf32>,
    %c2_i32_44 = arith.constant 2 : i32
    %344 = arith.muli %arg0, %c2_i32_44 : i32
    %c1_i32 = arith.constant 1 : i32
    %345 = arith.addi %344, %c1_i32 : i32
    %346 = arith.index_cast %345 : i32 to index
    %c0_45 = arith.constant 0 : index
    %347 = memref.load %arg1[%346, %c0_45] : memref<4x37xf32, #tpu.memory_space<smem>>
    %348 = arith.index_cast %345 : i32 to index
    %c1_46 = arith.constant 1 : index
    %349 = memref.load %arg1[%348, %c1_46] : memref<4x37xf32, #tpu.memory_space<smem>>
    %350 = arith.index_cast %345 : i32 to index
    %c2_47 = arith.constant 2 : index
    %351 = memref.load %arg1[%350, %c2_47] : memref<4x37xf32, #tpu.memory_space<smem>>
    %352 = arith.index_cast %345 : i32 to index
    %c3_48 = arith.constant 3 : index
    %353 = memref.load %arg1[%352, %c3_48] : memref<4x37xf32, #tpu.memory_space<smem>>
    %354 = arith.index_cast %345 : i32 to index
    %c4_49 = arith.constant 4 : index
    %355 = memref.load %arg1[%354, %c4_49] : memref<4x37xf32, #tpu.memory_space<smem>>
    %356 = arith.index_cast %345 : i32 to index
    %c5_50 = arith.constant 5 : index
    %357 = memref.load %arg1[%356, %c5_50] : memref<4x37xf32, #tpu.memory_space<smem>>
    %358 = arith.index_cast %345 : i32 to index
    %c6_51 = arith.constant 6 : index
    %359 = memref.load %arg1[%358, %c6_51] : memref<4x37xf32, #tpu.memory_space<smem>>
    %360 = arith.index_cast %345 : i32 to index
    %c7_52 = arith.constant 7 : index
    %361 = memref.load %arg1[%360, %c7_52] : memref<4x37xf32, #tpu.memory_space<smem>>
    %362 = arith.index_cast %345 : i32 to index
    %c8_53 = arith.constant 8 : index
    %363 = memref.load %arg1[%362, %c8_53] : memref<4x37xf32, #tpu.memory_space<smem>>
    %364 = arith.index_cast %345 : i32 to index
    %c9_54 = arith.constant 9 : index
    %365 = memref.load %arg1[%364, %c9_54] : memref<4x37xf32, #tpu.memory_space<smem>>
    %366 = arith.index_cast %345 : i32 to index
    %c10_55 = arith.constant 10 : index
    %367 = memref.load %arg1[%366, %c10_55] : memref<4x37xf32, #tpu.memory_space<smem>>
    %368 = arith.index_cast %345 : i32 to index
    %c11_56 = arith.constant 11 : index
    %369 = memref.load %arg1[%368, %c11_56] : memref<4x37xf32, #tpu.memory_space<smem>>
    %370 = arith.index_cast %345 : i32 to index
    %c12_57 = arith.constant 12 : index
    %371 = memref.load %arg1[%370, %c12_57] : memref<4x37xf32, #tpu.memory_space<smem>>
    %372 = arith.index_cast %345 : i32 to index
    %c13_58 = arith.constant 13 : index
    %373 = memref.load %arg1[%372, %c13_58] : memref<4x37xf32, #tpu.memory_space<smem>>
    %374 = arith.index_cast %345 : i32 to index
    %c14_59 = arith.constant 14 : index
    %375 = memref.load %arg1[%374, %c14_59] : memref<4x37xf32, #tpu.memory_space<smem>>
    %376 = arith.index_cast %345 : i32 to index
    %c15_60 = arith.constant 15 : index
    %377 = memref.load %arg1[%376, %c15_60] : memref<4x37xf32, #tpu.memory_space<smem>>
    %378 = arith.index_cast %345 : i32 to index
    %c16_61 = arith.constant 16 : index
    %379 = memref.load %arg1[%378, %c16_61] : memref<4x37xf32, #tpu.memory_space<smem>>
    %380 = arith.index_cast %345 : i32 to index
    %c17_62 = arith.constant 17 : index
    %381 = memref.load %arg1[%380, %c17_62] : memref<4x37xf32, #tpu.memory_space<smem>>
    %382 = arith.index_cast %345 : i32 to index
    %c18_63 = arith.constant 18 : index
    %383 = memref.load %arg1[%382, %c18_63] : memref<4x37xf32, #tpu.memory_space<smem>>
    %384 = arith.index_cast %345 : i32 to index
    %c19_64 = arith.constant 19 : index
    %385 = memref.load %arg1[%384, %c19_64] : memref<4x37xf32, #tpu.memory_space<smem>>
    %386 = arith.index_cast %345 : i32 to index
    %c20_65 = arith.constant 20 : index
    %387 = memref.load %arg1[%386, %c20_65] : memref<4x37xf32, #tpu.memory_space<smem>>
    %388 = arith.index_cast %345 : i32 to index
    %c21_66 = arith.constant 21 : index
    %389 = memref.load %arg1[%388, %c21_66] : memref<4x37xf32, #tpu.memory_space<smem>>
    %390 = arith.index_cast %345 : i32 to index
    %c22_67 = arith.constant 22 : index
    %391 = memref.load %arg1[%390, %c22_67] : memref<4x37xf32, #tpu.memory_space<smem>>
    %392 = arith.index_cast %345 : i32 to index
    %c23_68 = arith.constant 23 : index
    %393 = memref.load %arg1[%392, %c23_68] : memref<4x37xf32, #tpu.memory_space<smem>>
    %394 = arith.index_cast %345 : i32 to index
    %c24_69 = arith.constant 24 : index
    %395 = memref.load %arg1[%394, %c24_69] : memref<4x37xf32, #tpu.memory_space<smem>>
    %396 = arith.index_cast %345 : i32 to index
    %c25_70 = arith.constant 25 : index
    %397 = memref.load %arg1[%396, %c25_70] : memref<4x37xf32, #tpu.memory_space<smem>>
    %398 = arith.index_cast %345 : i32 to index
    %c26_71 = arith.constant 26 : index
    %399 = memref.load %arg1[%398, %c26_71] : memref<4x37xf32, #tpu.memory_space<smem>>
    %400 = arith.index_cast %345 : i32 to index
    %c27_72 = arith.constant 27 : index
    %401 = memref.load %arg1[%400, %c27_72] : memref<4x37xf32, #tpu.memory_space<smem>>
    %402 = arith.index_cast %345 : i32 to index
    %c28_73 = arith.constant 28 : index
    %403 = memref.load %arg1[%402, %c28_73] : memref<4x37xf32, #tpu.memory_space<smem>>
    %404 = arith.index_cast %345 : i32 to index
    %c29_74 = arith.constant 29 : index
    %405 = memref.load %arg1[%404, %c29_74] : memref<4x37xf32, #tpu.memory_space<smem>>
    %406 = arith.index_cast %345 : i32 to index
    %c30_75 = arith.constant 30 : index
    %407 = memref.load %arg1[%406, %c30_75] : memref<4x37xf32, #tpu.memory_space<smem>>
    %408 = arith.index_cast %345 : i32 to index
    %c31_76 = arith.constant 31 : index
    %409 = memref.load %arg1[%408, %c31_76] : memref<4x37xf32, #tpu.memory_space<smem>>
    %410 = arith.index_cast %345 : i32 to index
    %c32_77 = arith.constant 32 : index
    %411 = memref.load %arg1[%410, %c32_77] : memref<4x37xf32, #tpu.memory_space<smem>>
    %412 = arith.index_cast %345 : i32 to index
    %c33_78 = arith.constant 33 : index
    %413 = memref.load %arg1[%412, %c33_78] : memref<4x37xf32, #tpu.memory_space<smem>>
    %414 = arith.index_cast %345 : i32 to index
    %c34_79 = arith.constant 34 : index
    %415 = memref.load %arg1[%414, %c34_79] : memref<4x37xf32, #tpu.memory_space<smem>>
    %416 = arith.index_cast %345 : i32 to index
    %c35_80 = arith.constant 35 : index
    %417 = memref.load %arg1[%416, %c35_80] : memref<4x37xf32, #tpu.memory_space<smem>>
    %418 = arith.index_cast %345 : i32 to index
    %c36_81 = arith.constant 36 : index
    %419 = memref.load %arg1[%418, %c36_81] : memref<4x37xf32, #tpu.memory_space<smem>>
    %c1_82 = arith.constant 1 : index
    %c0_83 = arith.constant 0 : index
    %c0_84 = arith.constant 0 : index
    %420 = vector.load %arg4[%c1_82, %c0_83, %c0_84] : memref<2x2x128xf32, #tpu.memory_space<vmem>>, vector<1x2x128xf32>
    %421 = vector.shape_cast %420 : vector<1x2x128xf32> to vector<2x128xf32>
    %c1_85 = arith.constant 1 : index
    %c0_86 = arith.constant 0 : index
    %c0_87 = arith.constant 0 : index
    %c0_88 = arith.constant 0 : index
    %422 = vector.load %arg2[%c1_85, %c0_86, %c0_87, %c0_88] : memref<2x3x2x128xf32, #tpu.memory_space<vmem>>, vector<1x1x2x128xf32>
    %423 = vector.shape_cast %422 : vector<1x1x2x128xf32> to vector<2x128xf32>
    %c1_89 = arith.constant 1 : index
    %c1_90 = arith.constant 1 : index
    %c0_91 = arith.constant 0 : index
    %c0_92 = arith.constant 0 : index
    %424 = vector.load %arg2[%c1_89, %c1_90, %c0_91, %c0_92] : memref<2x3x2x128xf32, #tpu.memory_space<vmem>>, vector<1x1x2x128xf32>
    %425 = vector.shape_cast %424 : vector<1x1x2x128xf32> to vector<2x128xf32>
    %c1_93 = arith.constant 1 : index
    %c2_94 = arith.constant 2 : index
    %c0_95 = arith.constant 0 : index
    %c0_96 = arith.constant 0 : index
    %426 = vector.load %arg2[%c1_93, %c2_94, %c0_95, %c0_96] : memref<2x3x2x128xf32, #tpu.memory_space<vmem>>, vector<1x1x2x128xf32>
    %427 = vector.shape_cast %426 : vector<1x1x2x128xf32> to vector<2x128xf32>
    %c1_97 = arith.constant 1 : index
    %c0_98 = arith.constant 0 : index
    %c0_99 = arith.constant 0 : index
    %c0_100 = arith.constant 0 : index
    %428 = vector.load %arg3[%c1_97, %c0_98, %c0_99, %c0_100] : memref<2x3x2x128xf32, #tpu.memory_space<vmem>>, vector<1x1x2x128xf32>
    %429 = vector.shape_cast %428 : vector<1x1x2x128xf32> to vector<2x128xf32>
    %c1_101 = arith.constant 1 : index
    %c1_102 = arith.constant 1 : index
    %c0_103 = arith.constant 0 : index
    %c0_104 = arith.constant 0 : index
    %430 = vector.load %arg3[%c1_101, %c1_102, %c0_103, %c0_104] : memref<2x3x2x128xf32, #tpu.memory_space<vmem>>, vector<1x1x2x128xf32>
    %431 = vector.shape_cast %430 : vector<1x1x2x128xf32> to vector<2x128xf32>
    %c1_105 = arith.constant 1 : index
    %c2_106 = arith.constant 2 : index
    %c0_107 = arith.constant 0 : index
    %c0_108 = arith.constant 0 : index
    %432 = vector.load %arg3[%c1_105, %c2_106, %c0_107, %c0_108] : memref<2x3x2x128xf32, #tpu.memory_space<vmem>>, vector<1x1x2x128xf32>
    %433 = vector.shape_cast %432 : vector<1x1x2x128xf32> to vector<2x128xf32>
    %434 = vector.broadcast %365 : f32 to vector<2x128xf32>
    %435 = arith.subf %423, %434 : vector<2x128xf32>
    %436 = vector.broadcast %367 : f32 to vector<2x128xf32>
    %437 = arith.subf %425, %436 : vector<2x128xf32>
    %438 = vector.broadcast %369 : f32 to vector<2x128xf32>
    %439 = arith.subf %427, %438 : vector<2x128xf32>
    %440 = vector.broadcast %371 : f32 to vector<2x128xf32>
    %441 = arith.subf %423, %440 : vector<2x128xf32>
    %442 = vector.broadcast %373 : f32 to vector<2x128xf32>
    %443 = arith.subf %425, %442 : vector<2x128xf32>
    %444 = vector.broadcast %375 : f32 to vector<2x128xf32>
    %445 = arith.subf %427, %444 : vector<2x128xf32>
    %446 = vector.broadcast %347 : f32 to vector<2x128xf32>
    %447 = arith.mulf %446, %435 : vector<2x128xf32>
    %448 = vector.broadcast %353 : f32 to vector<2x128xf32>
    %449 = arith.mulf %448, %437 : vector<2x128xf32>
    %450 = arith.addf %447, %449 : vector<2x128xf32>
    %451 = vector.broadcast %359 : f32 to vector<2x128xf32>
    %452 = arith.mulf %451, %439 : vector<2x128xf32>
    %453 = arith.addf %450, %452 : vector<2x128xf32>
    %454 = vector.broadcast %349 : f32 to vector<2x128xf32>
    %455 = arith.mulf %454, %435 : vector<2x128xf32>
    %456 = vector.broadcast %355 : f32 to vector<2x128xf32>
    %457 = arith.mulf %456, %437 : vector<2x128xf32>
    %458 = arith.addf %455, %457 : vector<2x128xf32>
    %459 = vector.broadcast %361 : f32 to vector<2x128xf32>
    %460 = arith.mulf %459, %439 : vector<2x128xf32>
    %461 = arith.addf %458, %460 : vector<2x128xf32>
    %462 = vector.broadcast %351 : f32 to vector<2x128xf32>
    %463 = arith.mulf %462, %435 : vector<2x128xf32>
    %464 = vector.broadcast %357 : f32 to vector<2x128xf32>
    %465 = arith.mulf %464, %437 : vector<2x128xf32>
    %466 = arith.addf %463, %465 : vector<2x128xf32>
    %467 = vector.broadcast %363 : f32 to vector<2x128xf32>
    %468 = arith.mulf %467, %439 : vector<2x128xf32>
    %469 = arith.addf %466, %468 : vector<2x128xf32>
    %470 = vector.broadcast %377 : f32 to vector<2x128xf32>
    %471 = arith.mulf %470, %441 : vector<2x128xf32>
    %472 = vector.broadcast %383 : f32 to vector<2x128xf32>
    %473 = arith.mulf %472, %443 : vector<2x128xf32>
    %474 = arith.addf %471, %473 : vector<2x128xf32>
    %475 = vector.broadcast %389 : f32 to vector<2x128xf32>
    %476 = arith.mulf %475, %445 : vector<2x128xf32>
    %477 = arith.addf %474, %476 : vector<2x128xf32>
    %478 = vector.broadcast %379 : f32 to vector<2x128xf32>
    %479 = arith.mulf %478, %441 : vector<2x128xf32>
    %480 = vector.broadcast %385 : f32 to vector<2x128xf32>
    %481 = arith.mulf %480, %443 : vector<2x128xf32>
    %482 = arith.addf %479, %481 : vector<2x128xf32>
    %483 = vector.broadcast %391 : f32 to vector<2x128xf32>
    %484 = arith.mulf %483, %445 : vector<2x128xf32>
    %485 = arith.addf %482, %484 : vector<2x128xf32>
    %486 = vector.broadcast %381 : f32 to vector<2x128xf32>
    %487 = arith.mulf %486, %441 : vector<2x128xf32>
    %488 = vector.broadcast %387 : f32 to vector<2x128xf32>
    %489 = arith.mulf %488, %443 : vector<2x128xf32>
    %490 = arith.addf %487, %489 : vector<2x128xf32>
    %491 = vector.broadcast %393 : f32 to vector<2x128xf32>
    %492 = arith.mulf %491, %445 : vector<2x128xf32>
    %493 = arith.addf %490, %492 : vector<2x128xf32>
    %494 = arith.subf %477, %453 : vector<2x128xf32>
    %495 = math.absf %494 : vector<2x128xf32>
    %496 = arith.subf %485, %461 : vector<2x128xf32>
    %497 = math.absf %496 : vector<2x128xf32>
    %498 = arith.addf %495, %497 : vector<2x128xf32>
    %499 = arith.subf %493, %469 : vector<2x128xf32>
    %500 = math.absf %499 : vector<2x128xf32>
    %501 = arith.addf %498, %500 : vector<2x128xf32>
    %502 = arith.mulf %8, %501 : vector<2x128xf32>
    %503 = vector.shape_cast %502 : vector<2x128xf32> to vector<1x2x128xf32>
    %cst_109 = arith.constant dense<0.000000e+00> : vector<1xf32>
    %504 = vector.multi_reduction <add>, %503, %cst_109 [1, 2] : vector<1x2x128xf32> to vector<1xf32>
    %505 = vector.shape_cast %504 : vector<1xf32> to vector<1x1x1xf32>
    %506 = vector.extract %505[0, 0, 0] : f32 from vector<1x1x1xf32>
    %507 = vector.broadcast %506 : f32 to vector<1x1xf32>
    %508 = vector.broadcast %395 : f32 to vector<2x128xf32>
    %509 = arith.mulf %508, %441 : vector<2x128xf32>
    %510 = vector.broadcast %397 : f32 to vector<2x128xf32>
    %511 = arith.mulf %510, %443 : vector<2x128xf32>
    %512 = arith.addf %509, %511 : vector<2x128xf32>
    %513 = vector.broadcast %399 : f32 to vector<2x128xf32>
    %514 = arith.mulf %513, %445 : vector<2x128xf32>
    %515 = arith.addf %512, %514 : vector<2x128xf32>
    %516 = vector.broadcast %401 : f32 to vector<2x128xf32>
    %517 = arith.mulf %516, %441 : vector<2x128xf32>
    %518 = vector.broadcast %403 : f32 to vector<2x128xf32>
    %519 = arith.mulf %518, %443 : vector<2x128xf32>
    %520 = arith.addf %517, %519 : vector<2x128xf32>
    %521 = vector.broadcast %405 : f32 to vector<2x128xf32>
    %522 = arith.mulf %521, %445 : vector<2x128xf32>
    %523 = arith.addf %520, %522 : vector<2x128xf32>
    %524 = arith.subf %515, %461 : vector<2x128xf32>
    %525 = math.absf %524 : vector<2x128xf32>
    %526 = arith.mulf %421, %525 : vector<2x128xf32>
    %527 = vector.shape_cast %526 : vector<2x128xf32> to vector<1x2x128xf32>
    %cst_110 = arith.constant dense<0.000000e+00> : vector<1xf32>
    %528 = vector.multi_reduction <add>, %527, %cst_110 [1, 2] : vector<1x2x128xf32> to vector<1xf32>
    %529 = vector.shape_cast %528 : vector<1xf32> to vector<1x1x1xf32>
    %530 = vector.extract %529[0, 0, 0] : f32 from vector<1x1x1xf32>
    %531 = vector.broadcast %530 : f32 to vector<1x1xf32>
    %532 = arith.subf %523, %453 : vector<2x128xf32>
    %533 = math.absf %532 : vector<2x128xf32>
    %534 = arith.mulf %421, %533 : vector<2x128xf32>
    %535 = vector.shape_cast %534 : vector<2x128xf32> to vector<1x2x128xf32>
    %cst_111 = arith.constant dense<0.000000e+00> : vector<1xf32>
    %536 = vector.multi_reduction <add>, %535, %cst_111 [1, 2] : vector<1x2x128xf32> to vector<1xf32>
    %537 = vector.shape_cast %536 : vector<1xf32> to vector<1x1x1xf32>
    %538 = vector.extract %537[0, 0, 0] : f32 from vector<1x1x1xf32>
    %539 = vector.broadcast %538 : f32 to vector<1x1xf32>
    %540 = vector.broadcast %413 : f32 to vector<2x128xf32>
    %541 = arith.mulf %540, %453 : vector<2x128xf32>
    %542 = vector.broadcast %415 : f32 to vector<2x128xf32>
    %543 = arith.mulf %542, %461 : vector<2x128xf32>
    %544 = vector.broadcast %417 : f32 to vector<2x128xf32>
    %545 = arith.mulf %544, %469 : vector<2x128xf32>
    %546 = vector.broadcast %347 : f32 to vector<2x128xf32>
    %547 = arith.mulf %546, %541 : vector<2x128xf32>
    %548 = vector.broadcast %349 : f32 to vector<2x128xf32>
    %549 = arith.mulf %548, %543 : vector<2x128xf32>
    %550 = arith.addf %547, %549 : vector<2x128xf32>
    %551 = vector.broadcast %351 : f32 to vector<2x128xf32>
    %552 = arith.mulf %551, %545 : vector<2x128xf32>
    %553 = arith.addf %550, %552 : vector<2x128xf32>
    %554 = vector.broadcast %365 : f32 to vector<2x128xf32>
    %555 = arith.addf %553, %554 : vector<2x128xf32>
    %556 = arith.subf %429, %555 : vector<2x128xf32>
    %557 = math.absf %556 : vector<2x128xf32>
    %558 = vector.broadcast %353 : f32 to vector<2x128xf32>
    %559 = arith.mulf %558, %541 : vector<2x128xf32>
    %560 = vector.broadcast %355 : f32 to vector<2x128xf32>
    %561 = arith.mulf %560, %543 : vector<2x128xf32>
    %562 = arith.addf %559, %561 : vector<2x128xf32>
    %563 = vector.broadcast %357 : f32 to vector<2x128xf32>
    %564 = arith.mulf %563, %545 : vector<2x128xf32>
    %565 = arith.addf %562, %564 : vector<2x128xf32>
    %566 = vector.broadcast %367 : f32 to vector<2x128xf32>
    %567 = arith.addf %565, %566 : vector<2x128xf32>
    %568 = arith.subf %431, %567 : vector<2x128xf32>
    %569 = math.absf %568 : vector<2x128xf32>
    %570 = arith.addf %557, %569 : vector<2x128xf32>
    %571 = vector.broadcast %359 : f32 to vector<2x128xf32>
    %572 = arith.mulf %571, %541 : vector<2x128xf32>
    %573 = vector.broadcast %361 : f32 to vector<2x128xf32>
    %574 = arith.mulf %573, %543 : vector<2x128xf32>
    %575 = arith.addf %572, %574 : vector<2x128xf32>
    %576 = vector.broadcast %363 : f32 to vector<2x128xf32>
    %577 = arith.mulf %576, %545 : vector<2x128xf32>
    %578 = arith.addf %575, %577 : vector<2x128xf32>
    %579 = vector.broadcast %369 : f32 to vector<2x128xf32>
    %580 = arith.addf %578, %579 : vector<2x128xf32>
    %581 = arith.subf %433, %580 : vector<2x128xf32>
    %582 = math.absf %581 : vector<2x128xf32>
    %583 = arith.addf %570, %582 : vector<2x128xf32>
    %584 = arith.mulf %421, %583 : vector<2x128xf32>
    %585 = vector.shape_cast %584 : vector<2x128xf32> to vector<1x2x128xf32>
    %cst_112 = arith.constant dense<0.000000e+00> : vector<1xf32>
    %586 = vector.multi_reduction <add>, %585, %cst_112 [1, 2] : vector<1x2x128xf32> to vector<1xf32>
    %587 = vector.shape_cast %586 : vector<1xf32> to vector<1x1x1xf32>
    %588 = vector.extract %587[0, 0, 0] : f32 from vector<1x1x1xf32>
    %589 = vector.broadcast %588 : f32 to vector<1x1xf32>
    %590 = vector.broadcast %395 : f32 to vector<2x128xf32>
    %591 = arith.mulf %590, %515 : vector<2x128xf32>
    %592 = arith.subf %591, %441 : vector<2x128xf32>
    %cst_113 = arith.constant 2.000000e+00 : f32
    %593 = vector.broadcast %cst_113 : f32 to vector<2x128xf32>
    %594 = arith.mulf %593, %592 : vector<2x128xf32>
    %595 = arith.addf %423, %594 : vector<2x128xf32>
    %596 = arith.subf %595, %429 : vector<2x128xf32>
    %597 = math.absf %596 : vector<2x128xf32>
    %598 = vector.broadcast %397 : f32 to vector<2x128xf32>
    %599 = arith.mulf %598, %515 : vector<2x128xf32>
    %600 = arith.subf %599, %443 : vector<2x128xf32>
    %cst_114 = arith.constant 2.000000e+00 : f32
    %601 = vector.broadcast %cst_114 : f32 to vector<2x128xf32>
    %602 = arith.mulf %601, %600 : vector<2x128xf32>
    %603 = arith.addf %425, %602 : vector<2x128xf32>
    %604 = arith.subf %603, %431 : vector<2x128xf32>
    %605 = math.absf %604 : vector<2x128xf32>
    %606 = arith.addf %597, %605 : vector<2x128xf32>
    %607 = vector.broadcast %399 : f32 to vector<2x128xf32>
    %608 = arith.mulf %607, %515 : vector<2x128xf32>
    %609 = arith.subf %608, %445 : vector<2x128xf32>
    %cst_115 = arith.constant 2.000000e+00 : f32
    %610 = vector.broadcast %cst_115 : f32 to vector<2x128xf32>
    %611 = arith.mulf %610, %609 : vector<2x128xf32>
    %612 = arith.addf %427, %611 : vector<2x128xf32>
    %613 = arith.subf %612, %433 : vector<2x128xf32>
    %614 = math.absf %613 : vector<2x128xf32>
    %615 = arith.addf %606, %614 : vector<2x128xf32>
    %616 = arith.mulf %421, %615 : vector<2x128xf32>
    %617 = vector.shape_cast %616 : vector<2x128xf32> to vector<1x2x128xf32>
    %cst_116 = arith.constant dense<0.000000e+00> : vector<1xf32>
    %618 = vector.multi_reduction <add>, %617, %cst_116 [1, 2] : vector<1x2x128xf32> to vector<1xf32>
    %619 = vector.shape_cast %618 : vector<1xf32> to vector<1x1x1xf32>
    %620 = vector.extract %619[0, 0, 0] : f32 from vector<1x1x1xf32>
    %621 = vector.broadcast %620 : f32 to vector<1x1xf32>
    %622 = vector.broadcast %407 : f32 to vector<2x128xf32>
    %623 = arith.mulf %622, %441 : vector<2x128xf32>
    %624 = vector.broadcast %409 : f32 to vector<2x128xf32>
    %625 = arith.mulf %624, %443 : vector<2x128xf32>
    %626 = arith.addf %623, %625 : vector<2x128xf32>
    %627 = vector.broadcast %411 : f32 to vector<2x128xf32>
    %628 = arith.mulf %627, %445 : vector<2x128xf32>
    %629 = arith.addf %626, %628 : vector<2x128xf32>
    %cst_117 = arith.constant 2.000000e+00 : f32
    %630 = arith.mulf %cst_117, %407 : f32
    %631 = vector.broadcast %630 : f32 to vector<2x128xf32>
    %632 = arith.mulf %631, %629 : vector<2x128xf32>
    %633 = arith.subf %423, %632 : vector<2x128xf32>
    %634 = arith.subf %633, %429 : vector<2x128xf32>
    %635 = math.absf %634 : vector<2x128xf32>
    %cst_118 = arith.constant 2.000000e+00 : f32
    %636 = arith.mulf %cst_118, %409 : f32
    %637 = vector.broadcast %636 : f32 to vector<2x128xf32>
    %638 = arith.mulf %637, %629 : vector<2x128xf32>
    %639 = arith.subf %425, %638 : vector<2x128xf32>
    %640 = arith.subf %639, %431 : vector<2x128xf32>
    %641 = math.absf %640 : vector<2x128xf32>
    %642 = arith.addf %635, %641 : vector<2x128xf32>
    %cst_119 = arith.constant 2.000000e+00 : f32
    %643 = arith.mulf %cst_119, %411 : f32
    %644 = vector.broadcast %643 : f32 to vector<2x128xf32>
    %645 = arith.mulf %644, %629 : vector<2x128xf32>
    %646 = arith.subf %427, %645 : vector<2x128xf32>
    %647 = arith.subf %646, %433 : vector<2x128xf32>
    %648 = math.absf %647 : vector<2x128xf32>
    %649 = arith.addf %642, %648 : vector<2x128xf32>
    %650 = arith.mulf %421, %649 : vector<2x128xf32>
    %651 = vector.shape_cast %650 : vector<2x128xf32> to vector<1x2x128xf32>
    %cst_120 = arith.constant dense<0.000000e+00> : vector<1xf32>
    %652 = vector.multi_reduction <add>, %651, %cst_120 [1, 2] : vector<1x2x128xf32> to vector<1xf32>
    %653 = vector.shape_cast %652 : vector<1xf32> to vector<1x1x1xf32>
    %654 = vector.extract %653[0, 0, 0] : f32 from vector<1x1x1xf32>
    %655 = vector.broadcast %654 : f32 to vector<1x1xf32>
    %656 = arith.subf %423, %429 : vector<2x128xf32>
    %657 = math.absf %656 : vector<2x128xf32>
    %658 = arith.subf %425, %431 : vector<2x128xf32>
    %659 = math.absf %658 : vector<2x128xf32>
    %660 = arith.addf %657, %659 : vector<2x128xf32>
    %661 = arith.subf %427, %433 : vector<2x128xf32>
    %662 = math.absf %661 : vector<2x128xf32>
    %663 = arith.addf %660, %662 : vector<2x128xf32>
    %664 = arith.mulf %8, %663 : vector<2x128xf32>
    %665 = vector.shape_cast %664 : vector<2x128xf32> to vector<1x2x128xf32>
    %cst_121 = arith.constant dense<0.000000e+00> : vector<1xf32>
    %666 = vector.multi_reduction <add>, %665, %cst_121 [1, 2] : vector<1x2x128xf32> to vector<1xf32>
    %667 = vector.shape_cast %666 : vector<1xf32> to vector<1x1x1xf32>
    %668 = vector.extract %667[0, 0, 0] : f32 from vector<1x1x1xf32>
    %669 = vector.broadcast %668 : f32 to vector<1x1xf32>
    %cst_122 = arith.constant 0.000000e+00 : f32
    %670 = vector.broadcast %cst_122 : f32 to vector<1x1xf32>
    %cst_123 = arith.constant 1.000000e+00 : f32
    %671 = arith.subf %cst_123, %419 : f32
    %672 = math.absf %671 : f32
    %673 = vector.broadcast %672 : f32 to vector<1x1xf32>
    %674 = arith.addf %670, %673 : vector<1x1xf32>
    %675 = tpu.concatenate %507, %531, %539, %589, %621, %655, %669, %674 in 1 : vector<1x1xf32>, vector<1x1xf32>, vector<1x1xf32>, vector<1x1xf32>, vector<1x1xf32>, vector<1x1xf32>, vector<1x1xf32>, vector<1x1xf32> -> vector<1x8xf32>
    %c0_124 = arith.constant 0 : index
    %c1_125 = arith.constant 1 : index
    %c0_126 = arith.constant 0 : index
    %676 = vector.load %arg5[%c0_124, %c1_125, %c0_126] : memref<1x2x8xf32, #tpu.memory_space<vmem>>, vector<1x1x8xf32>
    %677 = vector.shape_cast %676 : vector<1x1x8xf32> to vector<1x8xf32>
    %678 = vector.shape_cast %675 : vector<1x8xf32> to vector<1x1x8xf32>
    tpu.vector_store %arg5[%c0_124, %c1_125, %c0_126], %678 {strides = array<i32>} : memref<1x2x8xf32, #tpu.memory_space<vmem>>, vector<1x1x8xf32>,
    return
  }
  func.func @transform_0(%arg0: i32) -> (i32, i32) {
    %c0_i32 = arith.constant 0 : i32
    %c0_i32_0 = arith.constant 0 : i32
    %c0_i32_1 = arith.constant 0 : i32
    return %c0_i32, %c0_i32_0 : i32, i32
  }
  func.func @transform_1(%arg0: i32) -> (i32, i32, i32, i32) {
    %c0_i32 = arith.constant 0 : i32
    %c0_i32_0 = arith.constant 0 : i32
    %c0_i32_1 = arith.constant 0 : i32
    %c0_i32_2 = arith.constant 0 : i32
    return %arg0, %c0_i32, %c0_i32_0, %c0_i32_1 : i32, i32, i32, i32
  }
  func.func @transform_2(%arg0: i32) -> (i32, i32, i32, i32) {
    %c0_i32 = arith.constant 0 : i32
    %c0_i32_0 = arith.constant 0 : i32
    %c0_i32_1 = arith.constant 0 : i32
    %c0_i32_2 = arith.constant 0 : i32
    return %arg0, %c0_i32, %c0_i32_0, %c0_i32_1 : i32, i32, i32, i32
  }
  func.func @transform_3(%arg0: i32) -> (i32, i32, i32) {
    %c0_i32 = arith.constant 0 : i32
    %c0_i32_0 = arith.constant 0 : i32
    %c0_i32_1 = arith.constant 0 : i32
    return %arg0, %c0_i32, %c0_i32_0 : i32, i32, i32
  }
  func.func @transform_4(%arg0: i32) -> (i32, i32, i32) {
    %c0_i32 = arith.constant 0 : i32
    %c0_i32_0 = arith.constant 0 : i32
    %c0_i32_1 = arith.constant 0 : i32
    return %arg0, %c0_i32, %c0_i32_0 : i32, i32, i32
  }
}

</mosaic_0001>

<llo_original>
// kernel: tpu_custom_call.1
$region0: #{tpu_custom_call.1}
  #allocation0 [shape = 'u32[]', space=smem, size = 0x4, offset = 0x4, fixed_abs, tag = 'smem constant byte address 0x4 - core index']
  #allocation1 [shape = 'u32[144,128]{1,0:T(1,128)}', space=vmem, size = 0x12000, scoped, tag = 'internal scratch']
  %s0 = inlined_call_operand.hbm [shape: f32[4,37], index: 0, kind: input, shape index: {}]
  %s1 = inlined_call_operand.hbm [shape: f32[4,3,2,128], index: 1, kind: input, shape index: {}]
  %s2 = inlined_call_operand.hbm [shape: f32[4,3,2,128], index: 2, kind: input, shape index: {}]
  %s3 = inlined_call_operand.hbm [shape: f32[4,2,128], index: 3, kind: input, shape index: {}]
  %s4 = inlined_call_operand.hbm [shape: f32[2,2,8], index: 4, kind: output, shape index: {}]
  %s5 = sld [smem:[#allocation0]]
  $region65: #{tpu_custom_call.1} parent=0
    _
  %s7 = ssub.s32 1, %s5
  %s8 = scalar_select 0, %s7, %s5
  $region1: #{tpu_custom_call.1} parent=0
    #allocation2 [shape = 'u8[2048]{0}', space=smem, size = 0x800, scoped, tag = 'input window, operand 0, single buffered']
    #allocation3 [shape = 's32[2]{0}', space=sflag, size = 0x8, scoped, tag = 'scoped memory for tpu_custom_call.1']
    #allocation4 [shape = 's32[2]{0}', space=sflag, size = 0x8, scoped, tag = 'scoped memory for tpu_custom_call.1']
    #allocation5 [shape = 's32[2]{0}', space=sflag, size = 0x8, scoped, tag = 'scoped memory for tpu_custom_call.1']
    #allocation6 [shape = 'u8[12288]{0}', space=vmem, size = 0x3000, scoped, tag = 'input window, operand 1']
    #allocation7 [shape = 'u8[12288]{0}', space=vmem, size = 0x3000, scoped, tag = 'input window, operand 2']
    #allocation8 [shape = 's32[2]{0}', space=sflag, size = 0x8, scoped, tag = 'scoped memory for tpu_custom_call.1']
    #allocation9 [shape = 'u8[4096]{0}', space=vmem, size = 0x1000, scoped, tag = 'input window, operand 3']
    #allocation10 [shape = 'u8[2048]{0}', space=vmem, size = 0x800, scoped, tag = 'output window, operand 0']
    %9 = vsyncpa [#allocation5], 0
    %10 = vsyncpa [#allocation3], 0
    %s11 = scalar_lea.sflag [#allocation3], 1
    %12 = vsyncpa %s11, 0
    %13 = vsyncpa [#allocation8], 0
    %s14 = scalar_lea.sflag [#allocation8], 1
    %15 = vsyncpa %s14, 0
    %16 = vsyncpa [#allocation4], 0
    %s17 = scalar_lea.sflag [#allocation4], 1
    %18 = vsyncpa %s17, 0
    loop: start=0, step=1, limit=4
    $region2: #{tpu_custom_call.1} parent=1 // loop_pre_header
      _
    $region3: #{tpu_custom_call.1} parent=1 // loop_header
      %s20 = sphi 0, %s24
      %p21 = scmp.ge.s32.totalorder %s20, 4
      %s28 = sphi 0, %s28
      %s30 = sphi 0, %s28
      %s31 = sphi 0, %s30
      %s45 = sphi 0, %s31
      %s51 = sphi 0, %s53
      %s54 = sphi 0, %s51
      %s55 = sphi 0, %s54
      %s71 = sphi 0, %s55
      %s77 = sphi 0, %s79
      %s80 = sphi 0, %s77
      %s81 = sphi 0, %s80
      %s97 = sphi 0, %s81
      %s103 = sphi 0, %s105
      %s106 = sphi 0, %s103
      %s107 = sphi 0, %s106
      %s123 = sphi 0, %s107
      %s129 = sphi 0, %s131
      %s132 = sphi 0, %s129
      %s133 = sphi 0, %s132
      %s149 = sphi 0, %s133
    $region4: #{tpu_custom_call.1} parent=1 // loop_header_branch
      %23 = sbr.rel (%p21) target = $region8
    $region5: #{tpu_custom_call.1} parent=1 // loop_body
      %s25 = ssub.s32 %s20, 1
      %s26 = ssub.s32 %s20, 2
      %s27 = sadd.s32 %s20, 1
      %s29 = sadd.s32 %s28, 1
      %p32 = scmp.eq.s32.totalorder %s20, 1
      %p33 = scmp.ne.s32.totalorder %s28, %s30
      %p34 = scmp.eq.s32.totalorder %s20, 0
      %p35 = por %p33, %p34
      %p36 = scmp.ne.s32.totalorder %s28, %s30
      %p37 = scmp.eq.s32.totalorder %s25, 1
      %p38 = por %p36, %p37
      %p39 = scmp.ne.s32.totalorder %s30, %s31
      %p40 = scmp.eq.s32.totalorder %s25, 0
      %p41 = por %p39, %p40
      %p42 = scmp.ne.s32.totalorder %s30, %s31
      %p43 = scmp.eq.s32.totalorder %s26, 1
      %p44 = por %p42, %p43
      %p46 = scmp.ne.s32.totalorder %s31, %s45
      %p47 = scmp.eq.s32.totalorder %s26, 0
      %p48 = por %p46, %p47
      %s49 = ssub.s32 %s20, %s27
      %p50 = scmp.eq.s32.totalorder %s49, 0
      %s52 = sadd.s32 %s51, 1
      %s53 = scalar_select %p50, %s51, %s52
      %p56 = pneg %p50
      %p57 = scmp.eq.s32.totalorder %s20, 1
      %p58 = por %p56, %p57
      %p59 = scmp.ne.s32.totalorder %s51, %s54
      %p60 = scmp.eq.s32.totalorder %s20, 0
      %p61 = por %p59, %p60
      %p62 = scmp.ne.s32.totalorder %s51, %s54
      %p63 = scmp.eq.s32.totalorder %s25, 1
      %p64 = por %p62, %p63
      %p65 = scmp.ne.s32.totalorder %s54, %s55
      %p66 = scmp.eq.s32.totalorder %s25, 0
      %p67 = por %p65, %p66
      %p68 = scmp.ne.s32.totalorder %s54, %s55
      %p69 = scmp.eq.s32.totalorder %s26, 1
      %p70 = por %p68, %p69
      %p72 = scmp.ne.s32.totalorder %s55, %s71
      %p73 = scmp.eq.s32.totalorder %s26, 0
      %p74 = por %p72, %p73
      %s75 = ssub.s32 %s20, %s27
      %p76 = scmp.eq.s32.totalorder %s75, 0
      %s78 = sadd.s32 %s77, 1
      %s79 = scalar_select %p76, %s77, %s78
      %p82 = pneg %p76
      %p83 = scmp.eq.s32.totalorder %s20, 1
      %p84 = por %p82, %p83
      %p85 = scmp.ne.s32.totalorder %s77, %s80
      %p86 = scmp.eq.s32.totalorder %s20, 0
      %p87 = por %p85, %p86
      %p88 = scmp.ne.s32.totalorder %s77, %s80
      %p89 = scmp.eq.s32.totalorder %s25, 1
      %p90 = por %p88, %p89
      %p91 = scmp.ne.s32.totalorder %s80, %s81
      %p92 = scmp.eq.s32.totalorder %s25, 0
      %p93 = por %p91, %p92
      %p94 = scmp.ne.s32.totalorder %s80, %s81
      %p95 = scmp.eq.s32.totalorder %s26, 1
      %p96 = por %p94, %p95
      %p98 = scmp.ne.s32.totalorder %s81, %s97
      %p99 = scmp.eq.s32.totalorder %s26, 0
      %p100 = por %p98, %p99
      %s101 = ssub.s32 %s20, %s27
      %p102 = scmp.eq.s32.totalorder %s101, 0
      %s104 = sadd.s32 %s103, 1
      %s105 = scalar_select %p102, %s103, %s104
      %p108 = pneg %p102
      %p109 = scmp.eq.s32.totalorder %s20, 1
      %p110 = por %p108, %p109
      %p111 = scmp.ne.s32.totalorder %s103, %s106
      %p112 = scmp.eq.s32.totalorder %s20, 0
      %p113 = por %p111, %p112
      %p114 = scmp.ne.s32.totalorder %s103, %s106
      %p115 = scmp.eq.s32.totalorder %s25, 1
      %p116 = por %p114, %p115
      %p117 = scmp.ne.s32.totalorder %s106, %s107
      %p118 = scmp.eq.s32.totalorder %s25, 0
      %p119 = por %p117, %p118
      %p120 = scmp.ne.s32.totalorder %s106, %s107
      %p121 = scmp.eq.s32.totalorder %s26, 1
      %p122 = por %p120, %p121
      %p124 = scmp.ne.s32.totalorder %s107, %s123
      %p125 = scmp.eq.s32.totalorder %s26, 0
      %p126 = por %p124, %p125
      %s127 = ssub.s32 %s20, %s27
      %p128 = scmp.eq.s32.totalorder %s127, 0
      %s130 = sadd.s32 %s129, 1
      %s131 = scalar_select %p128, %s129, %s130
      %p134 = pneg %p128
      %p135 = scmp.eq.s32.totalorder %s20, 1
      %p136 = por %p134, %p135
      %p137 = scmp.ne.s32.totalorder %s129, %s132
      %p138 = scmp.eq.s32.totalorder %s20, 0
      %p139 = por %p137, %p138
      %p140 = scmp.ne.s32.totalorder %s129, %s132
      %p141 = scmp.eq.s32.totalorder %s25, 1
      %p142 = por %p140, %p141
      %p143 = scmp.ne.s32.totalorder %s132, %s133
      %p144 = scmp.eq.s32.totalorder %s25, 0
      %p145 = por %p143, %p144
      %p146 = scmp.ne.s32.totalorder %s132, %s133
      %p147 = scmp.eq.s32.totalorder %s26, 1
      %p148 = por %p146, %p147
      %p150 = scmp.ne.s32.totalorder %s133, %s149
      %p151 = scmp.eq.s32.totalorder %s26, 0
      %p152 = por %p150, %p151
      %p153 = scmp.le.s32.totalorder 1, %s20
      %p154 = scmp.lt.s32.totalorder %s20, 3
      %p155 = pnand %p153, %p154
      %p156 = pneg %p155
      // Predicated region
      $region9: #{tpu_custom_call.1} parent=5 // pred_check
        _
      $region10: #{tpu_custom_call.1} parent=5 // pred_check_branch
        %158 = sbr.rel (%p155) target = $region12
      $region11: #{tpu_custom_call.1} parent=5 // pred_region
        %s159 = ssub.s32 %s20, 1
        // Predicated region
        $region13: #{tpu_custom_call.1} parent=11 // pred_check
          %p160 = pneg %p41
        $region14: #{tpu_custom_call.1} parent=11 // pred_check_branch
          %162 = sbr.rel (%p160) target = $region16
        $region15: #{tpu_custom_call.1} parent=11 // pred_region
          %s164 = ssub.s32 64, 64
          %165 = vsyncadd [#allocation5], %s164
          %168 = dma.hbm_to_smem %s0, 64, [#allocation2], [#allocation5]
        $region16: #{tpu_custom_call.1} parent=11 // pred_fallthru
          _
      $region12: #{tpu_custom_call.1} parent=5 // pred_fallthru
        _
      %p169 = scmp.lt.s32.totalorder %s20, 2
      // Predicated region
      $region17: #{tpu_custom_call.1} parent=5 // pred_check
        %p170 = pneg %p169
      $region18: #{tpu_custom_call.1} parent=5 // pred_check_branch
        %172 = sbr.rel (%p170) target = $region20
      $region19: #{tpu_custom_call.1} parent=5 // pred_region
        // Predicated region
        $region21: #{tpu_custom_call.1} parent=19 // pred_check
          %p173 = pneg %p61
        $region22: #{tpu_custom_call.1} parent=19 // pred_check_branch
          %175 = sbr.rel (%p173) target = $region24
        $region23: #{tpu_custom_call.1} parent=19 // pred_region
          %s176 = sand.u32 %s51, 1
          %s177 = scalar_lea.sflag [#allocation3], %s176
          %s178 = sand.u32 %s51, 1
          %s179 = smul.addr %s178, 12
          %s180 = scalar_lea.vmem [#allocation6], %s179
          %s181 = smul.u32 2, %s20
          %s183 = ssub.s32 192, 192
          %184 = vsyncadd %s177, %s183
          %s185 = smul.addr %s181, 3
          %s186 = smul.addr %s185, 32
          %s187 = scalar_lea.hbm %s1, %s186
          %s188 = sshll.u32 %s180, 4
          %s189 = int_to_ptr.vmem [resolvable:$true] %s188
          %194 = dma.hbm_to_vmem [thread:$0]  %s187, 192, %s189, %s177, 32, 32, 2
        $region24: #{tpu_custom_call.1} parent=19 // pred_fallthru
          _
        // Predicated region
        $region25: #{tpu_custom_call.1} parent=19 // pred_check
          %p195 = pneg %p87
        $region26: #{tpu_custom_call.1} parent=19 // pred_check_branch
          %197 = sbr.rel (%p195) target = $region28
        $region27: #{tpu_custom_call.1} parent=19 // pred_region
          %s198 = sand.u32 %s20, 1
          %s199 = scalar_lea.sflag [#allocation8], %s198
          %s200 = sand.u32 %s77, 1
          %s201 = smul.addr %s200, 12
          %s202 = scalar_lea.vmem [#allocation7], %s201
          %s203 = smul.u32 2, %s20
          %s205 = ssub.s32 192, 192
          %206 = vsyncadd %s199, %s205
          %s207 = smul.addr %s203, 3
          %s208 = smul.addr %s207, 32
          %s209 = scalar_lea.hbm %s2, %s208
          %s210 = sshll.u32 %s202, 4
          %s211 = int_to_ptr.vmem [resolvable:$true] %s210
          %216 = dma.hbm_to_vmem [thread:$0]  %s209, 192, %s211, %s199, 32, 32, 2
        $region28: #{tpu_custom_call.1} parent=19 // pred_fallthru
          _
        // Predicated region
        $region29: #{tpu_custom_call.1} parent=19 // pred_check
          %p217 = pneg %p113
        $region30: #{tpu_custom_call.1} parent=19 // pred_check_branch
          %219 = sbr.rel (%p217) target = $region32
        $region31: #{tpu_custom_call.1} parent=19 // pred_region
          %s220 = sand.u32 %s20, 1
          %s221 = scalar_lea.sflag [#allocation8], %s220
          %s222 = sand.u32 %s103, 1
          %s223 = smul.addr %s222, 4
          %s224 = scalar_lea.vmem [#allocation9], %s223
          %s225 = smul.u32 2, %s20
          %s227 = ssub.s32 64, 64
          %228 = vsyncadd %s221, %s227
          %s229 = smul.addr %s225, 32
          %s230 = scalar_lea.hbm %s3, %s229
          %s231 = sshll.u32 %s224, 4
          %s232 = int_to_ptr.vmem [resolvable:$true] %s231
          %237 = dma.hbm_to_vmem [thread:$0]  %s230, 64, %s232, %s221, 32, 32, 2
        $region32: #{tpu_custom_call.1} parent=19 // pred_fallthru
          _
      $region20: #{tpu_custom_call.1} parent=5 // pred_fallthru
        _
      %p238 = scmp.le.s32.totalorder 1, %s20
      %p239 = scmp.lt.s32.totalorder %s20, 3
      %p240 = pnand %p238, %p239
      %p241 = pneg %p240
      // Predicated region
      $region33: #{tpu_custom_call.1} parent=5 // pred_check
        _
      $region34: #{tpu_custom_call.1} parent=5 // pred_check_branch
        %243 = sbr.rel (%p240) target = $region36
      $region35: #{tpu_custom_call.1} parent=5 // pred_region
        %s244 = ssub.s32 %s20, 1
        // Predicated region
        $region37: #{tpu_custom_call.1} parent=35 // pred_check
          %p245 = pneg %p41
        $region38: #{tpu_custom_call.1} parent=35 // pred_check_branch
          %247 = sbr.rel (%p245) target = $region40
        $region39: #{tpu_custom_call.1} parent=35 // pred_region
          %248 = dma.done [#allocation5], 64
        $region40: #{tpu_custom_call.1} parent=35 // pred_fallthru
          _
        %s249 = sand.u32 %s54, 1
        %s250 = scalar_lea.sflag [#allocation3], %s249
        %s251 = sand.u32 %s54, 1
        %s252 = smul.addr %s251, 12
        %s253 = scalar_lea.vmem [#allocation6], %s252
        // Predicated region
        $region41: #{tpu_custom_call.1} parent=35 // pred_check
          %p254 = pneg %p67
        $region42: #{tpu_custom_call.1} parent=35 // pred_check_branch
          %256 = sbr.rel (%p254) target = $region44
        $region43: #{tpu_custom_call.1} parent=35 // pred_region
          %257 = dma.done %s250, 192
        $region44: #{tpu_custom_call.1} parent=35 // pred_fallthru
          _
        %s258 = sand.u32 %s25, 1
        %s259 = scalar_lea.sflag [#allocation8], %s258
        %s260 = sand.u32 %s80, 1
        %s261 = smul.addr %s260, 12
        %s262 = scalar_lea.vmem [#allocation7], %s261
        // Predicated region
        $region45: #{tpu_custom_call.1} parent=35 // pred_check
          %p263 = pneg %p93
        $region46: #{tpu_custom_call.1} parent=35 // pred_check_branch
          %265 = sbr.rel (%p263) target = $region48
        $region47: #{tpu_custom_call.1} parent=35 // pred_region
          %266 = dma.done %s259, 192
        $region48: #{tpu_custom_call.1} parent=35 // pred_fallthru
          _
        %s267 = sand.u32 %s25, 1
        %s268 = scalar_lea.sflag [#allocation8], %s267
        %s269 = sand.u32 %s106, 1
        %s270 = smul.addr %s269, 4
        %s271 = scalar_lea.vmem [#allocation9], %s270
        // Predicated region
        $region49: #{tpu_custom_call.1} parent=35 // pred_check
          %p272 = pneg %p119
        $region50: #{tpu_custom_call.1} parent=35 // pred_check_branch
          %274 = sbr.rel (%p272) target = $region52
        $region51: #{tpu_custom_call.1} parent=35 // pred_region
          %275 = dma.done %s268, 64
        $region52: #{tpu_custom_call.1} parent=35 // pred_fallthru
          _
        %276 = sfence
        %p277 = pneg %p41
        %p278 = pneg %p38
        %s279 = sand.u32 %s54, 1
        %s280 = scalar_lea.sflag [#allocation3], %s279
        %s281 = sand.u32 %s54, 1
        %s282 = smul.addr %s281, 12
        %s283 = scalar_lea.vmem [#allocation6], %s282
        %p284 = pneg %p67
        %p285 = pneg %p64
        %s286 = sand.u32 %s25, 1
        %s287 = scalar_lea.sflag [#allocation8], %s286
        %s288 = sand.u32 %s80, 1
        %s289 = smul.addr %s288, 12
        %s290 = scalar_lea.vmem [#allocation7], %s289
        %p291 = pneg %p93
        %p292 = pneg %p90
        %s293 = sand.u32 %s25, 1
        %s294 = scalar_lea.sflag [#allocation8], %s293
        %s295 = sand.u32 %s106, 1
        %s296 = smul.addr %s295, 4
        %s297 = scalar_lea.vmem [#allocation9], %s296
        %p298 = pneg %p119
        %p299 = pneg %p116
        %p300 = pneg %p145
        %p301 = pneg %p142
        %s302 = sand.u32 %s132, 1
        %s303 = scalar_lea.sflag [#allocation4], %s302
        %s304 = sand.u32 %s132, 1
        %s305 = smul.addr %s304, 2
        %s306 = scalar_lea.vmem [#allocation10], %s305
        %s307 = smul.u32 2, %s25
        %s308 = smul.u32 2, %s25
        %s309 = smul.u32 2, %s25
        %v310 = vlaneseq
        %v311 = vshrl.u32 %v310, 7
        %v312 = vmul.u32 %v311, 128
        %v313 = vlaneseq
        %v314 = vand.u32 %v313, 127
        %v315 = vadd.s32 %v312, %v314
        %vm316 = vcmp.lt.s32.totalorder %v315, 200
        %v317 = vsel %vm316, 1, 0
        %v318 = vcvt.s32.f32 %v317
        %s319 = smul.u32 %s25, 2
        %s320 = smul.u32 %s319, 128
        %s321 = sld [smem:[#allocation2 + %s320]]
        %s322 = sadd.s32 %s320, 1
        %s323 = sld [smem:[#allocation2 + %s322]]
        %s324 = sadd.s32 %s320, 2
        %s325 = sld [smem:[#allocation2 + %s324]]
        %s326 = sadd.s32 %s320, 3
        %s327 = sld [smem:[#allocation2 + %s326]]
        %s328 = sadd.s32 %s320, 4
        %s329 = sld [smem:[#allocation2 + %s328]]
        %s330 = sadd.s32 %s320, 5
        %s331 = sld [smem:[#allocation2 + %s330]]
        %s332 = sadd.s32 %s320, 6
        %s333 = sld [smem:[#allocation2 + %s332]]
        %s334 = sadd.s32 %s320, 7
        %s335 = sld [smem:[#allocation2 + %s334]]
        %s336 = sadd.s32 %s320, 8
        %s337 = sld [smem:[#allocation2 + %s336]]
        %s338 = sadd.s32 %s320, 9
        %s339 = sld [smem:[#allocation2 + %s338]]
        %s340 = sadd.s32 %s320, 10
        %s341 = sld [smem:[#allocation2 + %s340]]
        %s342 = sadd.s32 %s320, 11
        %s343 = sld [smem:[#allocation2 + %s342]]
        %s344 = sadd.s32 %s320, 12
        %s345 = sld [smem:[#allocation2 + %s344]]
        %s346 = sadd.s32 %s320, 13
        %s347 = sld [smem:[#allocation2 + %s346]]
        %s348 = sadd.s32 %s320, 14
        %s349 = sld [smem:[#allocation2 + %s348]]
        %s350 = sadd.s32 %s320, 15
        %s351 = sld [smem:[#allocation2 + %s350]]
        %s352 = sadd.s32 %s320, 16
        %s353 = sld [smem:[#allocation2 + %s352]]
        %s354 = sadd.s32 %s320, 17
        %s355 = sld [smem:[#allocation2 + %s354]]
        %s356 = sadd.s32 %s320, 18
        %s357 = sld [smem:[#allocation2 + %s356]]
        %s358 = sadd.s32 %s320, 19
        %s359 = sld [smem:[#allocation2 + %s358]]
        %s360 = sadd.s32 %s320, 20
        %s361 = sld [smem:[#allocation2 + %s360]]
        %s362 = sadd.s32 %s320, 21
        %s363 = sld [smem:[#allocation2 + %s362]]
        %s364 = sadd.s32 %s320, 22
        %s365 = sld [smem:[#allocation2 + %s364]]
        %s366 = sadd.s32 %s320, 23
        %s367 = sld [smem:[#allocation2 + %s366]]
        %s368 = sadd.s32 %s320, 24
        %s369 = sld [smem:[#allocation2 + %s368]]
        %s370 = sadd.s32 %s320, 25
        %s371 = sld [smem:[#allocation2 + %s370]]
        %s372 = sadd.s32 %s320, 26
        %s373 = sld [smem:[#allocation2 + %s372]]
        %s374 = sadd.s32 %s320, 27
        %s375 = sld [smem:[#allocation2 + %s374]]
        %s376 = sadd.s32 %s320, 28
        %s377 = sld [smem:[#allocation2 + %s376]]
        %s378 = sadd.s32 %s320, 29
        %s379 = sld [smem:[#allocation2 + %s378]]
        %s380 = sadd.s32 %s320, 30
        %s381 = sld [smem:[#allocation2 + %s380]]
        %s382 = sadd.s32 %s320, 31
        %s383 = sld [smem:[#allocation2 + %s382]]
        %s384 = sadd.s32 %s320, 32
        %s385 = sld [smem:[#allocation2 + %s384]]
        %s386 = sadd.s32 %s320, 33
        %s387 = sld [smem:[#allocation2 + %s386]]
        %s388 = sadd.s32 %s320, 34
        %s389 = sld [smem:[#allocation2 + %s388]]
        %s390 = sadd.s32 %s320, 35
        %s391 = sld [smem:[#allocation2 + %s390]]
        %s392 = sadd.s32 %s320, 36
        %s393 = sld [smem:[#allocation2 + %s392]]
        %v394 = vld [vmem:[%s271] sm:$0x3]
        %v395 = vld [vmem:[%s253] sm:$0x3]
        %s396 = scalar_lea.vmem %s253, 2 [#allocation6]
        %v397 = vld [vmem:[%s396] sm:$0x3]
        %s398 = scalar_lea.vmem %s253, 4 [#allocation6]
        %v399 = vld [vmem:[%s398] sm:$0x3]
        %v400 = vld [vmem:[%s262] sm:$0x3]
        %s401 = scalar_lea.vmem %s262, 2 [#allocation7]
        %v402 = vld [vmem:[%s401] sm:$0x3]
        %s403 = scalar_lea.vmem %s262, 4 [#allocation7]
        %v404 = vld [vmem:[%s403] sm:$0x3]
        %v405 = vstv %s339
        %v406 = vsub.f32 %v395, %v405
        %v407 = vstv %s341
        %v408 = vsub.f32 %v397, %v407
        %v409 = vstv %s343
        %v410 = vsub.f32 %v399, %v409
        %v411 = vstv %s345
        %v412 = vsub.f32 %v395, %v411
        %v413 = vstv %s347
        %v414 = vsub.f32 %v397, %v413
        %v415 = vstv %s349
        %v416 = vsub.f32 %v399, %v415
        %v417 = vstv %s321
        %v418 = vmul.f32 %v417, %v406
        %v419 = vstv %s327
        %v420 = vmul.f32 %v419, %v408
        %v421 = vadd.f32 %v418, %v420
        %v422 = vstv %s333
        %v423 = vmul.f32 %v422, %v410
        %v424 = vadd.f32 %v421, %v423
        %v425 = vstv %s323
        %v426 = vmul.f32 %v425, %v406
        %v427 = vstv %s329
        %v428 = vmul.f32 %v427, %v408
        %v429 = vadd.f32 %v426, %v428
        %v430 = vstv %s335
        %v431 = vmul.f32 %v430, %v410
        %v432 = vadd.f32 %v429, %v431
        %v433 = vstv %s325
        %v434 = vmul.f32 %v433, %v406
        %v435 = vstv %s331
        %v436 = vmul.f32 %v435, %v408
        %v437 = vadd.f32 %v434, %v436
        %v438 = vstv %s337
        %v439 = vmul.f32 %v438, %v410
        %v440 = vadd.f32 %v437, %v439
        %v441 = vstv %s351
        %v442 = vmul.f32 %v441, %v412
        %v443 = vstv %s357
        %v444 = vmul.f32 %v443, %v414
        %v445 = vadd.f32 %v442, %v444
        %v446 = vstv %s363
        %v447 = vmul.f32 %v446, %v416
        %v448 = vadd.f32 %v445, %v447
        %v449 = vstv %s353
        %v450 = vmul.f32 %v449, %v412
        %v451 = vstv %s359
        %v452 = vmul.f32 %v451, %v414
        %v453 = vadd.f32 %v450, %v452
        %v454 = vstv %s365
        %v455 = vmul.f32 %v454, %v416
        %v456 = vadd.f32 %v453, %v455
        %v457 = vstv %s355
        %v458 = vmul.f32 %v457, %v412
        %v459 = vstv %s361
        %v460 = vmul.f32 %v459, %v414
        %v461 = vadd.f32 %v458, %v460
        %v462 = vstv %s367
        %v463 = vmul.f32 %v462, %v416
        %v464 = vadd.f32 %v461, %v463
        %v465 = vsub.f32 %v448, %v424
        %v466 = vand.u32 2147483647, %v465
        %v467 = vsub.f32 %v456, %v432
        %v468 = vand.u32 2147483647, %v467
        %v469 = vadd.f32 %v466, %v468
        %v470 = vsub.f32 %v464, %v440
        %v471 = vand.u32 2147483647, %v470
        %v472 = vadd.f32 %v469, %v471
        %v473 = vmul.f32 %v318, %v472
        %vm474 = vcmask 1041408
        %v475 = vsel %vm474, %v473, 0.0
        %476 = vadd.xlane.f32.xlu0 %v475
        %v477 = vpop.xlane.xlu0 %476
        %v478 = vrot.slane %v477, 4
        %v479 = vadd.f32 %v477, %v478
        %v480 = vrot.slane %v479, 2
        %v481 = vadd.f32 %v479, %v480
        %v482 = vrot.slane %v481, 1
        %v483 = vadd.f32 %v481, %v482
        %s484 = vtos %v483
        %v485 = vstv %s484
        %v486 = vstv %s369
        %v487 = vmul.f32 %v486, %v412
        %v488 = vstv %s371
        %v489 = vmul.f32 %v488, %v414
        %v490 = vadd.f32 %v487, %v489
        %v491 = vstv %s373
        %v492 = vmul.f32 %v491, %v416
        %v493 = vadd.f32 %v490, %v492
        %v494 = vstv %s375
        %v495 = vmul.f32 %v494, %v412
        %v496 = vstv %s377
        %v497 = vmul.f32 %v496, %v414
        %v498 = vadd.f32 %v495, %v497
        %v499 = vstv %s379
        %v500 = vmul.f32 %v499, %v416
        %v501 = vadd.f32 %v498, %v500
        %v502 = vsub.f32 %v493, %v432
        %v503 = vand.u32 2147483647, %v502
        %v504 = vmul.f32 %v394, %v503
        %v505 = vsel %vm474, %v504, 0.0
        %506 = vadd.xlane.f32.xlu0 %v505
        %v507 = vpop.xlane.xlu0 %506
        %v508 = vrot.slane %v507, 4
        %v509 = vadd.f32 %v507, %v508
        %v510 = vrot.slane %v509, 2
        %v511 = vadd.f32 %v509, %v510
        %v512 = vrot.slane %v511, 1
        %v513 = vadd.f32 %v511, %v512
        %s514 = vtos %v513
        %v515 = vstv %s514
        %v516 = vsub.f32 %v501, %v424
        %v517 = vand.u32 2147483647, %v516
        %v518 = vmul.f32 %v394, %v517
        %v519 = vsel %vm474, %v518, 0.0
        %520 = vadd.xlane.f32.xlu0 %v519
        %v521 = vpop.xlane.xlu0 %520
        %v522 = vrot.slane %v521, 4
        %v523 = vadd.f32 %v521, %v522
        %v524 = vrot.slane %v523, 2
        %v525 = vadd.f32 %v523, %v524
        %v526 = vrot.slane %v525, 1
        %v527 = vadd.f32 %v525, %v526
        %s528 = vtos %v527
        %v529 = vstv %s528
        %v530 = vstv %s387
        %v531 = vmul.f32 %v530, %v424
        %v532 = vstv %s389
        %v533 = vmul.f32 %v532, %v432
        %v534 = vstv %s391
        %v535 = vmul.f32 %v534, %v440
        %v536 = vmul.f32 %v417, %v531
        %v537 = vmul.f32 %v425, %v533
        %v538 = vadd.f32 %v536, %v537
        %v539 = vmul.f32 %v433, %v535
        %v540 = vadd.f32 %v538, %v539
        %v541 = vadd.f32 %v540, %v405
        %v542 = vsub.f32 %v400, %v541
        %v543 = vand.u32 2147483647, %v542
        %v544 = vmul.f32 %v419, %v531
        %v545 = vmul.f32 %v427, %v533
        %v546 = vadd.f32 %v544, %v545
        %v547 = vmul.f32 %v435, %v535
        %v548 = vadd.f32 %v546, %v547
        %v549 = vadd.f32 %v548, %v407
        %v550 = vsub.f32 %v402, %v549
        %v551 = vand.u32 2147483647, %v550
        %v552 = vadd.f32 %v543, %v551
        %v553 = vmul.f32 %v422, %v531
        %v554 = vmul.f32 %v430, %v533
        %v555 = vadd.f32 %v553, %v554
        %v556 = vmul.f32 %v438, %v535
        %v557 = vadd.f32 %v555, %v556
        %v558 = vadd.f32 %v557, %v409
        %v559 = vsub.f32 %v404, %v558
        %v560 = vand.u32 2147483647, %v559
        %v561 = vadd.f32 %v552, %v560
        %v562 = vmul.f32 %v394, %v561
        %v563 = vsel %vm474, %v562, 0.0
        %564 = vadd.xlane.f32.xlu0 %v563
        %v565 = vpop.xlane.xlu0 %564
        %v566 = vrot.slane %v565, 4
        %v567 = vadd.f32 %v565, %v566
        %v568 = vrot.slane %v567, 2
        %v569 = vadd.f32 %v567, %v568
        %v570 = vrot.slane %v569, 1
        %v571 = vadd.f32 %v569, %v570
        %s572 = vtos %v571
        %v573 = vstv %s572
        %v574 = vmul.f32 %v486, %v493
        %v575 = vsub.f32 %v574, %v412
        %v576 = vmul.f32 %v575, 2.0
        %v577 = vadd.f32 %v395, %v576
        %v578 = vsub.f32 %v577, %v400
        %v579 = vand.u32 2147483647, %v578
        %v580 = vmul.f32 %v488, %v493
        %v581 = vsub.f32 %v580, %v414
        %v582 = vmul.f32 %v581, 2.0
        %v583 = vadd.f32 %v397, %v582
        %v584 = vsub.f32 %v583, %v402
        %v585 = vand.u32 2147483647, %v584
        %v586 = vadd.f32 %v579, %v585
        %v587 = vmul.f32 %v491, %v493
        %v588 = vsub.f32 %v587, %v416
        %v589 = vmul.f32 %v588, 2.0
        %v590 = vadd.f32 %v399, %v589
        %v591 = vsub.f32 %v590, %v404
        %v592 = vand.u32 2147483647, %v591
        %v593 = vadd.f32 %v586, %v592
        %v594 = vmul.f32 %v394, %v593
        %v595 = vsel %vm474, %v594, 0.0
        %596 = vadd.xlane.f32.xlu0 %v595
        %v597 = vpop.xlane.xlu0 %596
        %v598 = vrot.slane %v597, 4
        %v599 = vadd.f32 %v597, %v598
        %v600 = vrot.slane %v599, 2
        %v601 = vadd.f32 %v599, %v600
        %v602 = vrot.slane %v601, 1
        %v603 = vadd.f32 %v601, %v602
        %s604 = vtos %v603
        %v605 = vstv %s604
        %v606 = vstv %s381
        %v607 = vmul.f32 %v606, %v412
        %v608 = vstv %s383
        %v609 = vmul.f32 %v608, %v414
        %v610 = vadd.f32 %v607, %v609
        %v611 = vstv %s385
        %v612 = vmul.f32 %v611, %v416
        %v613 = vadd.f32 %v610, %v612
        %s614 = smul.f32 %s381, 2.0
        %v615 = vstv %s614
        %v616 = vmul.f32 %v615, %v613
        %v617 = vsub.f32 %v395, %v616
        %v618 = vsub.f32 %v617, %v400
        %v619 = vand.u32 2147483647, %v618
        %s620 = smul.f32 %s383, 2.0
        %v621 = vstv %s620
        %v622 = vmul.f32 %v621, %v613
        %v623 = vsub.f32 %v397, %v622
        %v624 = vsub.f32 %v623, %v402
        %v625 = vand.u32 2147483647, %v624
        %v626 = vadd.f32 %v619, %v625
        %s627 = smul.f32 %s385, 2.0
        %v628 = vstv %s627
        %v629 = vmul.f32 %v628, %v613
        %v630 = vsub.f32 %v399, %v629
        %v631 = vsub.f32 %v630, %v404
        %v632 = vand.u32 2147483647, %v631
        %v633 = vadd.f32 %v626, %v632
        %v634 = vmul.f32 %v394, %v633
        %v635 = vsel %vm474, %v634, 0.0
        %636 = vadd.xlane.f32.xlu0 %v635
        %v637 = vpop.xlane.xlu0 %636
        %v638 = vrot.slane %v637, 4
        %v639 = vadd.f32 %v637, %v638
        %v640 = vrot.slane %v639, 2
        %v641 = vadd.f32 %v639, %v640
        %v642 = vrot.slane %v641, 1
        %v643 = vadd.f32 %v641, %v642
        %s644 = vtos %v643
        %v645 = vstv %s644
        %v646 = vsub.f32 %v395, %v400
        %v647 = vand.u32 2147483647, %v646
        %v648 = vsub.f32 %v397, %v402
        %v649 = vand.u32 2147483647, %v648
        %v650 = vadd.f32 %v647, %v649
        %v651 = vsub.f32 %v399, %v404
        %v652 = vand.u32 2147483647, %v651
        %v653 = vadd.f32 %v650, %v652
        %v654 = vmul.f32 %v318, %v653
        %v655 = vsel %vm474, %v654, 0.0
        %656 = vadd.xlane.f32.xlu0 %v655
        %v657 = vpop.xlane.xlu0 %656
        %v658 = vrot.slane %v657, 4
        %v659 = vadd.f32 %v657, %v658
        %v660 = vrot.slane %v659, 2
        %v661 = vadd.f32 %v659, %v660
        %v662 = vrot.slane %v661, 1
        %v663 = vadd.f32 %v661, %v662
        %s664 = vtos %v663
        %v665 = vstv %s664
        %s666 = ssub.f32 1.0, %s393
        %s667 = sand.u32 2147483647, %s666
        %v668 = vstv %s667
        %v669 = vadd.f32 %v668, 0.0
        %vm670 = vcmask 7168
        %v671 = vsel %vm670, %v485, %v515
        %vm672 = vcmask 15360
        %v673 = vsel %vm672, %v671, %v529
        %vm674 = vcmask 23552
        %v675 = vsel %vm674, %v673, %v573
        %vm676 = vcmask 31744
        %v677 = vsel %vm676, %v675, %v605
        %vm678 = vcmask 39936
        %v679 = vsel %vm678, %v677, %v645
        %vm680 = vcmask 48128
        %v681 = vsel %vm680, %v679, %v665
        %vm682 = vcmask 56320
        %v683 = vsel %vm682, %v681, %v669
        %vm684 = vcmask 57344
        %685 = vst.msk [vmem:[%s306] sm:$0x1] %vm684, %v683
        %s686 = sadd.s32 %s319, 1
        %s687 = smul.u32 %s686, 128
        %s688 = sld [smem:[#allocation2 + %s687]]
        %s689 = sadd.s32 %s687, 1
        %s690 = sld [smem:[#allocation2 + %s689]]
        %s691 = sadd.s32 %s687, 2
        %s692 = sld [smem:[#allocation2 + %s691]]
        %s693 = sadd.s32 %s687, 3
        %s694 = sld [smem:[#allocation2 + %s693]]
        %s695 = sadd.s32 %s687, 4
        %s696 = sld [smem:[#allocation2 + %s695]]
        %s697 = sadd.s32 %s687, 5
        %s698 = sld [smem:[#allocation2 + %s697]]
        %s699 = sadd.s32 %s687, 6
        %s700 = sld [smem:[#allocation2 + %s699]]
        %s701 = sadd.s32 %s687, 7
        %s702 = sld [smem:[#allocation2 + %s701]]
        %s703 = sadd.s32 %s687, 8
        %s704 = sld [smem:[#allocation2 + %s703]]
        %s705 = sadd.s32 %s687, 9
        %s706 = sld [smem:[#allocation2 + %s705]]
        %s707 = sadd.s32 %s687, 10
        %s708 = sld [smem:[#allocation2 + %s707]]
        %s709 = sadd.s32 %s687, 11
        %s710 = sld [smem:[#allocation2 + %s709]]
        %s711 = sadd.s32 %s687, 12
        %s712 = sld [smem:[#allocation2 + %s711]]
        %s713 = sadd.s32 %s687, 13
        %s714 = sld [smem:[#allocation2 + %s713]]
        %s715 = sadd.s32 %s687, 14
        %s716 = sld [smem:[#allocation2 + %s715]]
        %s717 = sadd.s32 %s687, 15
        %s718 = sld [smem:[#allocation2 + %s717]]
        %s719 = sadd.s32 %s687, 16
        %s720 = sld [smem:[#allocation2 + %s719]]
        %s721 = sadd.s32 %s687, 17
        %s722 = sld [smem:[#allocation2 + %s721]]
        %s723 = sadd.s32 %s687, 18
        %s724 = sld [smem:[#allocation2 + %s723]]
        %s725 = sadd.s32 %s687, 19
        %s726 = sld [smem:[#allocation2 + %s725]]
        %s727 = sadd.s32 %s687, 20
        %s728 = sld [smem:[#allocation2 + %s727]]
        %s729 = sadd.s32 %s687, 21
        %s730 = sld [smem:[#allocation2 + %s729]]
        %s731 = sadd.s32 %s687, 22
        %s732 = sld [smem:[#allocation2 + %s731]]
        %s733 = sadd.s32 %s687, 23
        %s734 = sld [smem:[#allocation2 + %s733]]
        %s735 = sadd.s32 %s687, 24
        %s736 = sld [smem:[#allocation2 + %s735]]
        %s737 = sadd.s32 %s687, 25
        %s738 = sld [smem:[#allocation2 + %s737]]
        %s739 = sadd.s32 %s687, 26
        %s740 = sld [smem:[#allocation2 + %s739]]
        %s741 = sadd.s32 %s687, 27
        %s742 = sld [smem:[#allocation2 + %s741]]
        %s743 = sadd.s32 %s687, 28
        %s744 = sld [smem:[#allocation2 + %s743]]
        %s745 = sadd.s32 %s687, 29
        %s746 = sld [smem:[#allocation2 + %s745]]
        %s747 = sadd.s32 %s687, 30
        %s748 = sld [smem:[#allocation2 + %s747]]
        %s749 = sadd.s32 %s687, 31
        %s750 = sld [smem:[#allocation2 + %s749]]
        %s751 = sadd.s32 %s687, 32
        %s752 = sld [smem:[#allocation2 + %s751]]
        %s753 = sadd.s32 %s687, 33
        %s754 = sld [smem:[#allocation2 + %s753]]
        %s755 = sadd.s32 %s687, 34
        %s756 = sld [smem:[#allocation2 + %s755]]
        %s757 = sadd.s32 %s687, 35
        %s758 = sld [smem:[#allocation2 + %s757]]
        %s759 = sadd.s32 %s687, 36
        %s760 = sld [smem:[#allocation2 + %s759]]
        %s761 = scalar_lea.vmem %s271, 2 [#allocation9]
        %v762 = vld [vmem:[%s761] sm:$0x3]
        %s763 = scalar_lea.vmem %s253, 6 [#allocation6]
        %v764 = vld [vmem:[%s763] sm:$0x3]
        %s765 = scalar_lea.vmem %s253, 8 [#allocation6]
        %v766 = vld [vmem:[%s765] sm:$0x3]
        %s767 = scalar_lea.vmem %s253, 10 [#allocation6]
        %v768 = vld [vmem:[%s767] sm:$0x3]
        %s769 = scalar_lea.vmem %s262, 6 [#allocation7]
        %v770 = vld [vmem:[%s769] sm:$0x3]
        %s771 = scalar_lea.vmem %s262, 8 [#allocation7]
        %v772 = vld [vmem:[%s771] sm:$0x3]
        %s773 = scalar_lea.vmem %s262, 10 [#allocation7]
        %v774 = vld [vmem:[%s773] sm:$0x3]
        %v775 = vstv %s706
        %v776 = vsub.f32 %v764, %v775
        %v777 = vstv %s708
        %v778 = vsub.f32 %v766, %v777
        %v779 = vstv %s710
        %v780 = vsub.f32 %v768, %v779
        %v781 = vstv %s712
        %v782 = vsub.f32 %v764, %v781
        %v783 = vstv %s714
        %v784 = vsub.f32 %v766, %v783
        %v785 = vstv %s716
        %v786 = vsub.f32 %v768, %v785
        %v787 = vstv %s688
        %v788 = vmul.f32 %v787, %v776
        %v789 = vstv %s694
        %v790 = vmul.f32 %v789, %v778
        %v791 = vadd.f32 %v788, %v790
        %v792 = vstv %s700
        %v793 = vmul.f32 %v792, %v780
        %v794 = vadd.f32 %v791, %v793
        %v795 = vstv %s690
        %v796 = vmul.f32 %v795, %v776
        %v797 = vstv %s696
        %v798 = vmul.f32 %v797, %v778
        %v799 = vadd.f32 %v796, %v798
        %v800 = vstv %s702
        %v801 = vmul.f32 %v800, %v780
        %v802 = vadd.f32 %v799, %v801
        %v803 = vstv %s692
        %v804 = vmul.f32 %v803, %v776
        %v805 = vstv %s698
        %v806 = vmul.f32 %v805, %v778
        %v807 = vadd.f32 %v804, %v806
        %v808 = vstv %s704
        %v809 = vmul.f32 %v808, %v780
        %v810 = vadd.f32 %v807, %v809
        %v811 = vstv %s718
        %v812 = vmul.f32 %v811, %v782
        %v813 = vstv %s724
        %v814 = vmul.f32 %v813, %v784
        %v815 = vadd.f32 %v812, %v814
        %v816 = vstv %s730
        %v817 = vmul.f32 %v816, %v786
        %v818 = vadd.f32 %v815, %v817
        %v819 = vstv %s720
        %v820 = vmul.f32 %v819, %v782
        %v821 = vstv %s726
        %v822 = vmul.f32 %v821, %v784
        %v823 = vadd.f32 %v820, %v822
        %v824 = vstv %s732
        %v825 = vmul.f32 %v824, %v786
        %v826 = vadd.f32 %v823, %v825
        %v827 = vstv %s722
        %v828 = vmul.f32 %v827, %v782
        %v829 = vstv %s728
        %v830 = vmul.f32 %v829, %v784
        %v831 = vadd.f32 %v828, %v830
        %v832 = vstv %s734
        %v833 = vmul.f32 %v832, %v786
        %v834 = vadd.f32 %v831, %v833
        %v835 = vsub.f32 %v818, %v794
        %v836 = vand.u32 2147483647, %v835
        %v837 = vsub.f32 %v826, %v802
        %v838 = vand.u32 2147483647, %v837
        %v839 = vadd.f32 %v836, %v838
        %v840 = vsub.f32 %v834, %v810
        %v841 = vand.u32 2147483647, %v840
        %v842 = vadd.f32 %v839, %v841
        %v843 = vmul.f32 %v318, %v842
        %v844 = vsel %vm474, %v843, 0.0
        %845 = vadd.xlane.f32.xlu0 %v844
        %v846 = vpop.xlane.xlu0 %845
        %v847 = vrot.slane %v846, 4
        %v848 = vadd.f32 %v846, %v847
        %v849 = vrot.slane %v848, 2
        %v850 = vadd.f32 %v848, %v849
        %v851 = vrot.slane %v850, 1
        %v852 = vadd.f32 %v850, %v851
        %s853 = vtos %v852
        %v854 = vstv %s853
        %v855 = vstv %s736
        %v856 = vmul.f32 %v855, %v782
        %v857 = vstv %s738
        %v858 = vmul.f32 %v857, %v784
        %v859 = vadd.f32 %v856, %v858
        %v860 = vstv %s740
        %v861 = vmul.f32 %v860, %v786
        %v862 = vadd.f32 %v859, %v861
        %v863 = vstv %s742
        %v864 = vmul.f32 %v863, %v782
        %v865 = vstv %s744
        %v866 = vmul.f32 %v865, %v784
        %v867 = vadd.f32 %v864, %v866
        %v868 = vstv %s746
        %v869 = vmul.f32 %v868, %v786
        %v870 = vadd.f32 %v867, %v869
        %v871 = vsub.f32 %v862, %v802
        %v872 = vand.u32 2147483647, %v871
        %v873 = vmul.f32 %v762, %v872
        %v874 = vsel %vm474, %v873, 0.0
        %875 = vadd.xlane.f32.xlu0 %v874
        %v876 = vpop.xlane.xlu0 %875
        %v877 = vrot.slane %v876, 4
        %v878 = vadd.f32 %v876, %v877
        %v879 = vrot.slane %v878, 2
        %v880 = vadd.f32 %v878, %v879
        %v881 = vrot.slane %v880, 1
        %v882 = vadd.f32 %v880, %v881
        %s883 = vtos %v882
        %v884 = vstv %s883
        %v885 = vsub.f32 %v870, %v794
        %v886 = vand.u32 2147483647, %v885
        %v887 = vmul.f32 %v762, %v886
        %v888 = vsel %vm474, %v887, 0.0
        %889 = vadd.xlane.f32.xlu0 %v888
        %v890 = vpop.xlane.xlu0 %889
        %v891 = vrot.slane %v890, 4
        %v892 = vadd.f32 %v890, %v891
        %v893 = vrot.slane %v892, 2
        %v894 = vadd.f32 %v892, %v893
        %v895 = vrot.slane %v894, 1
        %v896 = vadd.f32 %v894, %v895
        %s897 = vtos %v896
        %v898 = vstv %s897
        %v899 = vstv %s754
        %v900 = vmul.f32 %v899, %v794
        %v901 = vstv %s756
        %v902 = vmul.f32 %v901, %v802
        %v903 = vstv %s758
        %v904 = vmul.f32 %v903, %v810
        %v905 = vmul.f32 %v787, %v900
        %v906 = vmul.f32 %v795, %v902
        %v907 = vadd.f32 %v905, %v906
        %v908 = vmul.f32 %v803, %v904
        %v909 = vadd.f32 %v907, %v908
        %v910 = vadd.f32 %v909, %v775
        %v911 = vsub.f32 %v770, %v910
        %v912 = vand.u32 2147483647, %v911
        %v913 = vmul.f32 %v789, %v900
        %v914 = vmul.f32 %v797, %v902
        %v915 = vadd.f32 %v913, %v914
        %v916 = vmul.f32 %v805, %v904
        %v917 = vadd.f32 %v915, %v916
        %v918 = vadd.f32 %v917, %v777
        %v919 = vsub.f32 %v772, %v918
        %v920 = vand.u32 2147483647, %v919
        %v921 = vadd.f32 %v912, %v920
        %v922 = vmul.f32 %v792, %v900
        %v923 = vmul.f32 %v800, %v902
        %v924 = vadd.f32 %v922, %v923
        %v925 = vmul.f32 %v808, %v904
        %v926 = vadd.f32 %v924, %v925
        %v927 = vadd.f32 %v926, %v779
        %v928 = vsub.f32 %v774, %v927
        %v929 = vand.u32 2147483647, %v928
        %v930 = vadd.f32 %v921, %v929
        %v931 = vmul.f32 %v762, %v930
        %v932 = vsel %vm474, %v931, 0.0
        %933 = vadd.xlane.f32.xlu0 %v932
        %v934 = vpop.xlane.xlu0 %933
        %v935 = vrot.slane %v934, 4
        %v936 = vadd.f32 %v934, %v935
        %v937 = vrot.slane %v936, 2
        %v938 = vadd.f32 %v936, %v937
        %v939 = vrot.slane %v938, 1
        %v940 = vadd.f32 %v938, %v939
        %s941 = vtos %v940
        %v942 = vstv %s941
        %v943 = vmul.f32 %v855, %v862
        %v944 = vsub.f32 %v943, %v782
        %v945 = vmul.f32 %v944, 2.0
        %v946 = vadd.f32 %v764, %v945
        %v947 = vsub.f32 %v946, %v770
        %v948 = vand.u32 2147483647, %v947
        %v949 = vmul.f32 %v857, %v862
        %v950 = vsub.f32 %v949, %v784
        %v951 = vmul.f32 %v950, 2.0
        %v952 = vadd.f32 %v766, %v951
        %v953 = vsub.f32 %v952, %v772
        %v954 = vand.u32 2147483647, %v953
        %v955 = vadd.f32 %v948, %v954
        %v956 = vmul.f32 %v860, %v862
        %v957 = vsub.f32 %v956, %v786
        %v958 = vmul.f32 %v957, 2.0
        %v959 = vadd.f32 %v768, %v958
        %v960 = vsub.f32 %v959, %v774
        %v961 = vand.u32 2147483647, %v960
        %v962 = vadd.f32 %v955, %v961
        %v963 = vmul.f32 %v762, %v962
        %v964 = vsel %vm474, %v963, 0.0
        %965 = vadd.xlane.f32.xlu0 %v964
        %v966 = vpop.xlane.xlu0 %965
        %v967 = vrot.slane %v966, 4
        %v968 = vadd.f32 %v966, %v967
        %v969 = vrot.slane %v968, 2
        %v970 = vadd.f32 %v968, %v969
        %v971 = vrot.slane %v970, 1
        %v972 = vadd.f32 %v970, %v971
        %s973 = vtos %v972
        %v974 = vstv %s973
        %v975 = vstv %s748
        %v976 = vmul.f32 %v975, %v782
        %v977 = vstv %s750
        %v978 = vmul.f32 %v977, %v784
        %v979 = vadd.f32 %v976, %v978
        %v980 = vstv %s752
        %v981 = vmul.f32 %v980, %v786
        %v982 = vadd.f32 %v979, %v981
        %s983 = smul.f32 %s748, 2.0
        %v984 = vstv %s983
        %v985 = vmul.f32 %v984, %v982
        %v986 = vsub.f32 %v764, %v985
        %v987 = vsub.f32 %v986, %v770
        %v988 = vand.u32 2147483647, %v987
        %s989 = smul.f32 %s750, 2.0
        %v990 = vstv %s989
        %v991 = vmul.f32 %v990, %v982
        %v992 = vsub.f32 %v766, %v991
        %v993 = vsub.f32 %v992, %v772
        %v994 = vand.u32 2147483647, %v993
        %v995 = vadd.f32 %v988, %v994
        %s996 = smul.f32 %s752, 2.0
        %v997 = vstv %s996
        %v998 = vmul.f32 %v997, %v982
        %v999 = vsub.f32 %v768, %v998
        %v1000 = vsub.f32 %v999, %v774
        %v1001 = vand.u32 2147483647, %v1000
        %v1002 = vadd.f32 %v995, %v1001
        %v1003 = vmul.f32 %v762, %v1002
        %v1004 = vsel %vm474, %v1003, 0.0
        %1005 = vadd.xlane.f32.xlu0 %v1004
        %v1006 = vpop.xlane.xlu0 %1005
        %v1007 = vrot.slane %v1006, 4
        %v1008 = vadd.f32 %v1006, %v1007
        %v1009 = vrot.slane %v1008, 2
        %v1010 = vadd.f32 %v1008, %v1009
        %v1011 = vrot.slane %v1010, 1
        %v1012 = vadd.f32 %v1010, %v1011
        %s1013 = vtos %v1012
        %v1014 = vstv %s1013
        %v1015 = vsub.f32 %v764, %v770
        %v1016 = vand.u32 2147483647, %v1015
        %v1017 = vsub.f32 %v766, %v772
        %v1018 = vand.u32 2147483647, %v1017
        %v1019 = vadd.f32 %v1016, %v1018
        %v1020 = vsub.f32 %v768, %v774
        %v1021 = vand.u32 2147483647, %v1020
        %v1022 = vadd.f32 %v1019, %v1021
        %v1023 = vmul.f32 %v318, %v1022
        %v1024 = vsel %vm474, %v1023, 0.0
        %1025 = vadd.xlane.f32.xlu0 %v1024
        %v1026 = vpop.xlane.xlu0 %1025
        %v1027 = vrot.slane %v1026, 4
        %v1028 = vadd.f32 %v1026, %v1027
        %v1029 = vrot.slane %v1028, 2
        %v1030 = vadd.f32 %v1028, %v1029
        %v1031 = vrot.slane %v1030, 1
        %v1032 = vadd.f32 %v1030, %v1031
        %s1033 = vtos %v1032
        %v1034 = vstv %s1033
        %s1035 = ssub.f32 1.0, %s760
        %s1036 = sand.u32 2147483647, %s1035
        %v1037 = vstv %s1036
        %v1038 = vadd.f32 %v1037, 0.0
        %v1039 = vsel %vm670, %v854, %v884
        %v1040 = vsel %vm672, %v1039, %v898
        %v1041 = vsel %vm674, %v1040, %v942
        %v1042 = vsel %vm676, %v1041, %v974
        %v1043 = vsel %vm678, %v1042, %v1014
        %v1044 = vsel %vm680, %v1043, %v1034
        %v1045 = vsel %vm682, %v1044, %v1038
        %1046 = vst.msk [vmem:[%s306 + $0x1] sm:$0x1] %vm684, %v1045
        %s1047 = sand.u32 %s132, 1
        %s1048 = scalar_lea.sflag [#allocation4], %s1047
        %s1049 = sand.u32 %s132, 1
        %s1050 = smul.addr %s1049, 2
        %s1051 = scalar_lea.vmem [#allocation10], %s1050
        // Predicated region
        $region53: #{tpu_custom_call.1} parent=35 // pred_check
          %p1052 = pneg %p142
        $region54: #{tpu_custom_call.1} parent=35 // pred_check_branch
          %1054 = sbr.rel (%p1052) target = $region56
        $region55: #{tpu_custom_call.1} parent=35 // pred_region
          %s1056 = ssub.s32 32, 32
          %1057 = vsyncadd %s1048, %s1056
          %s1058 = smul.addr %s25, 32
          %s1059 = scalar_lea.hbm %s4, %s1058
          %s1061 = sshll.u32 %s1051, 4
          %s1062 = int_to_ptr.vmem [resolvable:$true] %s1061
          %1064 = dma.vmem_to_hbm [thread:$0]  %s1062, 32, %s1059, %s1048
        $region56: #{tpu_custom_call.1} parent=35 // pred_fallthru
          _
      $region36: #{tpu_custom_call.1} parent=5 // pred_fallthru
        _
      %p1065 = scmp.le.s32.totalorder 2, %s20
      // Predicated region
      $region57: #{tpu_custom_call.1} parent=5 // pred_check
        %p1066 = pneg %p1065
      $region58: #{tpu_custom_call.1} parent=5 // pred_check_branch
        %1068 = sbr.rel (%p1066) target = $region60
      $region59: #{tpu_custom_call.1} parent=5 // pred_region
        %s1069 = ssub.s32 %s20, 2
        // Predicated region
        $region61: #{tpu_custom_call.1} parent=59 // pred_check
          %p1070 = pneg %p148
        $region62: #{tpu_custom_call.1} parent=59 // pred_check_branch
          %1072 = sbr.rel (%p1070) target = $region64
        $region63: #{tpu_custom_call.1} parent=59 // pred_region
          %s1073 = sand.u32 %s133, 1
          %s1074 = scalar_lea.sflag [#allocation4], %s1073
          %s1075 = sand.u32 %s133, 1
          %s1076 = smul.addr %s1075, 2
          %s1077 = scalar_lea.vmem [#allocation10], %s1076
          %1078 = dma.done %s1074, 32
        $region64: #{tpu_custom_call.1} parent=59 // pred_fallthru
          _
      $region60: #{tpu_custom_call.1} parent=5 // pred_fallthru
        _
    $region6: #{tpu_custom_call.1} parent=1 // loop_footer
      %s24 = sadd.s32 1, %s20
    $region7: #{tpu_custom_call.1} parent=1 // loop_footer_branch
      %19 = sbr.rel target = $region3
    $region8: #{tpu_custom_call.1} parent=1 // loop_exit
      _
    %1079 = vsyncpa [#allocation3], 1
    %s1080 = scalar_lea.sflag [#allocation3], 1
    %1081 = vsyncpa %s1080, 1
    %1082 = vsyncpa [#allocation8], 1
    %s1083 = scalar_lea.sflag [#allocation8], 1
    %1084 = vsyncpa %s1083, 1
    %1085 = vsyncpa [#allocation4], 1
    %s1086 = scalar_lea.sflag [#allocation4], 1
    %1087 = vsyncpa %s1086, 1
    %1088 = vsyncpa [#allocation5], 1
    %s1089 = scalar_lea.sflag [#allocation5], 1
    %1090 = vsyncpa %s1089, 1

</llo_original>
